<compile_context>
chip_gen: v7x
topology: tpu7x:2x2x1
jax: 0.10.0
libtpu: 0.0.40
codegen_flags: <defaults>
</compile_context>

<pallas_src>
import jax
import jax.numpy as jnp
import numpy as np
from jax.experimental import pallas as pl
from jax.experimental.pallas import tpu as pltpu


def _col_attention_kernel(x_ref, w_all_ref, b_all_ref, gamma_ref, o_ref):
    # x block: (1, Wt, h, c) -- Wt width-columns of one batch element.
    x = x_ref[0].astype(jnp.float32)                 # (Wt, h, c); compute in f32
    wt, h, c = x.shape
    n_out = w_all_ref.shape[1]
    qk = (n_out - c) // 2

    # Fused Q/K/V projection: one MXU matmul over all Wt*h pixels of the block.
    # The reshape only merges leading dims (lane dim c untouched) -> free for h%8==0.
    xf = x.reshape(wt * h, c)
    f = jnp.dot(xf, w_all_ref[...], preferred_element_type=jnp.float32) + b_all_ref[...]
    f = f.reshape(wt, h, n_out)                      # (Wt, h, 2*qk + c)

    q = f[:, :, 0:qk]                                # (Wt, h, qk)
    k = f[:, :, qk:2 * qk]                           # (Wt, h, qk)
    v = f[:, :, 2 * qk:]                             # (Wt, h, c)

    # Scores over key-height, batched over the Wt columns (leading batch dim).
    s = jnp.einsum('whq,wkq->whk', q, k, preferred_element_type=jnp.float32)
    m = jnp.max(s, axis=-1, keepdims=True)
    p = jnp.exp(s - m)
    denom = jnp.sum(p, axis=-1, keepdims=True)       # (Wt, h, 1)

    # attn @ V with the exact 1/denom folded in afterwards (only Wt*h scalars).
    out = jnp.einsum('whk,wkc->whc', p, v, preferred_element_type=jnp.float32)
    out = out * (1.0 / denom)

    gamma = gamma_ref[0]                             # SMEM scalar
    o_ref[0] = (gamma * out + x).astype(o_ref.dtype)


def _cdiv(a, b):
    return (a + b - 1) // b


def _vmem_capacity_bytes():
    """Physical VMEM of the current part; conservative 64 MiB fallback (v7x size)."""
    try:
        cap = int(pltpu.get_tpu_info().vmem_capacity_bytes)
        if cap > 0:
            return cap
    except Exception:
        pass
    return 64 * 1024 * 1024


def _pick_col_tile(b, w, h, c, qk, vmem_limit_bytes):
    """Largest column tile Wt whose per-block VMEM footprint fits half the limit,
    while keeping >= 4 grid steps (when possible) for megacore sharding and
    pipeline overlap. Wt need NOT divide W (ragged last block is masked)."""
    n_out = 2 * qk + c
    budget = vmem_limit_bytes // 2        # headroom for compiler scratch & copies
    # Constant-index weight/bias blocks are still double-buffered by default.
    fixed = 2 * 4 * (c * n_out + n_out)
    per_col = 4 * h * (
        2 * 2 * c          # x block + out block, each double-buffered
        + 2 * n_out        # fused projection result + sliced Q/K/V copies
        + 2 * h            # scores + exp(scores)
        + c                # attn @ V result
    )
    cap = max(1, (budget - fixed) // per_col)
    wt = int(min(cap, w))
    min_steps = 4
    if b * _cdiv(w, wt) < min_steps:
        wt = max(1, _cdiv(w, _cdiv(min_steps, b)))
    return wt


@jax.jit
def col_attention(x_nchw, wq, bq, wk, bk, wv, bv, gamma):
    """x_nchw: (b, c, h, w). Returns (b, c, h, w) in x_nchw.dtype."""
    b, c, h, w = x_nchw.shape
    qk = wq.shape[0]
    n_out = 2 * qk + c

    vmem_cap = _vmem_capacity_bytes()
    vmem_limit = int(min(0.75 * vmem_cap, 64 * 1024 * 1024))   # 64MiB on 128MiB parts, ~48MiB on v7x
    wt = _pick_col_tile(b, w, h, c, qk, vmem_limit)
    n_wt = pl.cdiv(w, wt)

    # NCHW -> (b, w, h, c): each grid step works on a (Wt, h, c) slab of columns.
    # TODO(synk): fold this relayout into the kernel (see header note).
    x_bwhc = jnp.transpose(x_nchw, (0, 3, 2, 1))

    # Fused, pre-transposed projection weights: a single (c, 2*qk+c) matmul per block.
    w_all = jnp.concatenate([wq.T, wk.T, wv.T], axis=1).astype(jnp.float32)   # (c, n_out)
    b_all = jnp.concatenate([bq, bk, bv]).reshape(1, n_out).astype(jnp.float32)
    gamma1 = gamma.reshape(1).astype(jnp.float32)

    itemsize = jnp.dtype(x_nchw.dtype).itemsize
    cost = pl.CostEstimate(
        flops=2 * b * w * h * (c * n_out + h * (qk + c)),
        transcendentals=b * w * h * h,
        bytes_accessed=2 * b * c * h * w * itemsize + 4 * (c * n_out + n_out + 1),
    )

    out_bwhc = pl.pallas_call(
        _col_attention_kernel,
        out_shape=jax.ShapeDtypeStruct((b, w, h, c), x_nchw.dtype),
        grid_spec=pltpu.PrefetchScalarGridSpec(
            num_scalar_prefetch=0,
            grid=(b, n_wt),
            in_specs=[
                pl.BlockSpec((1, wt, h, c), lambda i, j: (i, j, 0, 0)),   # x
                pl.BlockSpec((c, n_out), lambda i, j: (0, 0)),            # [Wq^T|Wk^T|Wv^T]
                pl.BlockSpec((1, n_out), lambda i, j: (0, 0)),            # [bq|bk|bv]
                pl.BlockSpec(memory_space=pltpu.MemorySpace.SMEM),        # gamma (scalar)
            ],
            out_specs=pl.BlockSpec((1, wt, h, c), lambda i, j: (i, j, 0, 0)),
        ),
        compiler_params=pltpu.CompilerParams(
            dimension_semantics=("parallel", "parallel"),
            vmem_limit_bytes=vmem_limit),
        cost_estimate=cost,
        input_output_aliases={0: 0},   # out = gamma*attn_out + x : block-local RMW
    )(x_bwhc, w_all, b_all, gamma1)

    # (b, w, h, c) -> NCHW
    return jnp.transpose(out_bwhc, (0, 3, 2, 1))


def _reference(x, wq, bq, wk, bk, wv, bv, gamma):
    """Pure-JAX transcription of the PyTorch forward (1x1 convs == per-pixel linear)."""
    b, c, h, w = x.shape
    Q = jnp.einsum('bchw,oc->bohw', x, wq) + bq[None, :, None, None]
    K = jnp.einsum('bchw,oc->bohw', x, wk) + bk[None, :, None, None]
    V = jnp.einsum('bchw,oc->bohw', x, wv) + bv[None, :, None, None]
    Q = Q.transpose(0, 3, 1, 2).reshape(b * w, -1, h).transpose(0, 2, 1)   # (bw, h, qk)
    K = K.transpose(0, 3, 1, 2).reshape(b * w, -1, h)                      # (bw, qk, h)
    V = V.transpose(0, 3, 1, 2).reshape(b * w, -1, h)                      # (bw, c, h)
    attn = jax.nn.softmax(jnp.einsum('bij,bjk->bik', Q, K), axis=2)        # (bw, h, h)
    out = jnp.einsum('bcj,bij->bci', V, attn)                              # bmm(V, attn^T)
    out = out.reshape(b, w, c, h).transpose(0, 2, 3, 1)                    # (b, c, h, w)
    return gamma[0] * out + x


if __name__ == "__main__":
    # Small shapes consistent with the module: x is (batch, in_dim, H, W).
    batch, in_dim, q_k_dim, H, W = 2, 4, 4, 16, 16

    key = jax.random.PRNGKey(0)
    kx, kq, kk, kv, kbq, kbk, kbv = jax.random.split(key, 7)

    x = jax.random.normal(kx, (batch, in_dim, H, W), dtype=jnp.float32)

    # Deterministic synthetic parameters (Conv2d 1x1 == dense over channels).
    wq = 0.1 * jax.random.normal(kq, (q_k_dim, in_dim), dtype=jnp.float32)
    wk = 0.1 * jax.random.normal(kk, (q_k_dim, in_dim), dtype=jnp.float32)
    wv = 0.1 * jax.random.normal(kv, (in_dim, in_dim), dtype=jnp.float32)
    bq = 0.05 * jax.random.normal(kbq, (q_k_dim,), dtype=jnp.float32)
    bk = 0.05 * jax.random.normal(kbk, (q_k_dim,), dtype=jnp.float32)
    bv = 0.05 * jax.random.normal(kbv, (in_dim,), dtype=jnp.float32)
    # PyTorch initializes gamma to 0 (output == input); use a nonzero value so the
    # attention path is actually exercised in the check below.
    gamma = jnp.array([0.5], dtype=jnp.float32)

    out = col_attention(x, wq, bq, wk, bk, wv, bv, gamma)
    out = jax.block_until_ready(out)

    ref = _reference(x, wq, bq, wk, bk, wv, bv, gamma)
    # Exact softmax normalization now (approx reciprocal removed) -> f32-tight check.
    np.testing.assert_allclose(np.asarray(out), np.asarray(ref), rtol=1e-4, atol=1e-5)

    print("KERNEL_OK")
</pallas_src>

<mosaic_0001>
module attributes {stable_mosaic.version = 11 : i64} {
  func.func @_col_attention_kernel(%arg0: i32, %arg1: i32, %arg2: memref<1x8x16x4xf32, #tpu.memory_space<vmem>>, %arg3: memref<4x12xf32, #tpu.memory_space<vmem>>, %arg4: memref<1x12xf32, #tpu.memory_space<vmem>>, %arg5: memref<1xf32, #tpu.memory_space<smem>>, %arg6: memref<1x8x16x4xf32, #tpu.memory_space<vmem>>) attributes {dimension_semantics = [#tpu.dimension_semantics<parallel>, #tpu.dimension_semantics<parallel>], iteration_bounds = array<i64: 2, 2>, scalar_prefetch = 0 : i64, scratch_operands = 0 : i64, tpu.core_type = #tpu.core_type<tc>, window_params = [{transform_indices = @transform_0, window_bounds = array<i64: 1, 8, 16, 4>}, {pipeline_mode = #tpu.pipeline_mode<synchronous>, transform_indices = @transform_1, window_bounds = array<i64: 4, 12>}, {pipeline_mode = #tpu.pipeline_mode<synchronous>, transform_indices = @transform_2, window_bounds = array<i64: 1, 12>}, {transform_indices = @transform_3, window_bounds = array<i64: 1>}, {transform_indices = @transform_4, window_bounds = array<i64: 1, 8, 16, 4>}]} {
    %c0 = arith.constant 0 : index
    %c0_0 = arith.constant 0 : index
    %c0_1 = arith.constant 0 : index
    %c0_2 = arith.constant 0 : index
    %0 = vector.load %arg2[%c0, %c0_0, %c0_1, %c0_2] : memref<1x8x16x4xf32, #tpu.memory_space<vmem>>, vector<1x8x16x4xf32>
    %1 = vector.shape_cast %0 : vector<1x8x16x4xf32> to vector<8x16x4xf32>
    %2 = vector.shape_cast %1 : vector<8x16x4xf32> to vector<128x4xf32>
    %c0_3 = arith.constant 0 : index
    %c0_4 = arith.constant 0 : index
    %3 = vector.load %arg3[%c0_3, %c0_4] : memref<4x12xf32, #tpu.memory_space<vmem>>, vector<4x12xf32>
    %cst = arith.constant dense<0.000000e+00> : vector<128x12xf32>
    %4 = tpu.matmul %2, %3, %cst {dimension_numbers = #tpu.dot_dimension_numbers<[1], [0], [0], [1], [0, 0, 1, 1], [], []>} : vector<128x4xf32>, vector<4x12xf32>, vector<128x12xf32> -> vector<128x12xf32>
    %c0_5 = arith.constant 0 : index
    %c0_6 = arith.constant 0 : index
    %5 = vector.load %arg4[%c0_5, %c0_6] : memref<1x12xf32, #tpu.memory_space<vmem>>, vector<1x12xf32>
    %6 = vector.broadcast %5 : vector<1x12xf32> to vector<128x12xf32>
    %7 = arith.addf %4, %6 : vector<128x12xf32>
    %8 = vector.shape_cast %7 : vector<128x12xf32> to vector<8x16x12xf32>
    %9 = vector.extract_strided_slice %8 {offsets = [0, 0, 0], sizes = [8, 16, 4], strides = [1, 1, 1]} : vector<8x16x12xf32> to vector<8x16x4xf32>
    %10 = vector.extract_strided_slice %8 {offsets = [0, 0, 4], sizes = [8, 16, 4], strides = [1, 1, 1]} : vector<8x16x12xf32> to vector<8x16x4xf32>
    %11 = vector.extract_strided_slice %8 {offsets = [0, 0, 8], sizes = [8, 16, 4], strides = [1, 1, 1]} : vector<8x16x12xf32> to vector<8x16x4xf32>
    "tpu.trace_start"() <{level = 10 : i32, message = "whq,wkq->whk"}> : () -> ()
    %cst_7 = arith.constant dense<0.000000e+00> : vector<8x16x16xf32>
    %12 = tpu.matmul %9, %10, %cst_7 {dimension_numbers = #tpu.dot_dimension_numbers<[2], [2], [1], [1], [0, 0, 0, 1, 1, 1], [0], [0]>} : vector<8x16x4xf32>, vector<8x16x4xf32>, vector<8x16x16xf32> -> vector<8x16x16xf32>
    "tpu.trace_stop"() : () -> ()
    %cst_8 = arith.constant dense<0xFF800000> : vector<8x16xf32>
    %13 = vector.multi_reduction <maximumf>, %12, %cst_8 [2] : vector<8x16x16xf32> to vector<8x16xf32>
    %14 = vector.shape_cast %13 : vector<8x16xf32> to vector<8x16x1xf32>
    %15 = vector.broadcast %14 : vector<8x16x1xf32> to vector<8x16x16xf32>
    %16 = arith.subf %12, %15 : vector<8x16x16xf32>
    %17 = math.exp %16 : vector<8x16x16xf32>
    %cst_9 = arith.constant dense<0.000000e+00> : vector<8x16xf32>
    %18 = vector.multi_reduction <add>, %17, %cst_9 [2] : vector<8x16x16xf32> to vector<8x16xf32>
    %19 = vector.shape_cast %18 : vector<8x16xf32> to vector<8x16x1xf32>
    "tpu.trace_start"() <{level = 10 : i32, message = "whk,wkc->whc"}> : () -> ()
    %cst_10 = arith.constant dense<0.000000e+00> : vector<8x16x4xf32>
    %20 = tpu.matmul %17, %11, %cst_10 {dimension_numbers = #tpu.dot_dimension_numbers<[2], [1], [1], [2], [0, 0, 0, 1, 1, 2], [0], [0]>} : vector<8x16x16xf32>, vector<8x16x4xf32>, vector<8x16x4xf32> -> vector<8x16x4xf32>
    "tpu.trace_stop"() : () -> ()
    %cst_11 = arith.constant 1.000000e+00 : f32
    %21 = vector.broadcast %cst_11 : f32 to vector<8x16x1xf32>
    %22 = arith.divf %21, %19 : vector<8x16x1xf32>
    %23 = vector.broadcast %22 : vector<8x16x1xf32> to vector<8x16x4xf32>
    %24 = arith.mulf %20, %23 : vector<8x16x4xf32>
    %c0_12 = arith.constant 0 : index
    %25 = memref.load %arg5[%c0_12] : memref<1xf32, #tpu.memory_space<smem>>
    %26 = vector.broadcast %25 : f32 to vector<8x16x4xf32>
    %27 = arith.mulf %26, %24 : vector<8x16x4xf32>
    %28 = arith.addf %27, %1 : vector<8x16x4xf32>
    %c0_13 = arith.constant 0 : index
    %c0_14 = arith.constant 0 : index
    %c0_15 = arith.constant 0 : index
    %c0_16 = arith.constant 0 : index
    %29 = vector.load %arg6[%c0_13, %c0_14, %c0_15, %c0_16] : memref<1x8x16x4xf32, #tpu.memory_space<vmem>>, vector<1x8x16x4xf32>
    %30 = vector.shape_cast %29 : vector<1x8x16x4xf32> to vector<8x16x4xf32>
    %31 = vector.shape_cast %28 : vector<8x16x4xf32> to vector<1x8x16x4xf32>
    tpu.vector_store %arg6[%c0_13, %c0_14, %c0_15, %c0_16], %31 {strides = array<i32>} : memref<1x8x16x4xf32, #tpu.memory_space<vmem>>, vector<1x8x16x4xf32>,
    return
  }
  func.func @transform_0(%arg0: i32, %arg1: i32) -> (i32, i32, i32, i32) {
    %c0_i32 = arith.constant 0 : i32
    %c0_i32_0 = arith.constant 0 : i32
    %c0_i32_1 = arith.constant 0 : i32
    return %arg0, %arg1, %c0_i32, %c0_i32_0 : i32, i32, i32, i32
  }
  func.func @transform_1(%arg0: i32, %arg1: i32) -> (i32, i32) {
    %c0_i32 = arith.constant 0 : i32
    %c0_i32_0 = arith.constant 0 : i32
    %c0_i32_1 = arith.constant 0 : i32
    return %c0_i32, %c0_i32_0 : i32, i32
  }
  func.func @transform_2(%arg0: i32, %arg1: i32) -> (i32, i32) {
    %c0_i32 = arith.constant 0 : i32
    %c0_i32_0 = arith.constant 0 : i32
    %c0_i32_1 = arith.constant 0 : i32
    return %c0_i32, %c0_i32_0 : i32, i32
  }
  func.func @transform_3(%arg0: i32, %arg1: i32) -> i32 {
    %c0_i32 = arith.constant 0 : i32
    %c0_i32_0 = arith.constant 0 : i32
    return %c0_i32 : i32
  }
  func.func @transform_4(%arg0: i32, %arg1: i32) -> (i32, i32, i32, i32) {
    %c0_i32 = arith.constant 0 : i32
    %c0_i32_0 = arith.constant 0 : i32
    %c0_i32_1 = arith.constant 0 : i32
    return %arg0, %arg1, %c0_i32, %c0_i32_0 : i32, i32, i32, i32
  }
}

</mosaic_0001>

<llo_original>
// kernel: col_attention.1
$region0: #{col_attention.1}
  #allocation0 [shape = 'u32[]', space=smem, size = 0x4, offset = 0x4, fixed_abs, tag = 'smem constant byte address 0x4 - core index']
  #allocation1 [shape = 'u32[144,128]{1,0:T(1,128)}', space=vmem, size = 0x12000, scoped, tag = 'internal scratch']
  #allocation2 [shape = 'f32[1]{0:T(128)S(6)}', space=smem, size = 0x200, scoped, tag = 'scoped memory for col_attention.1']
  %s0 = inlined_call_operand.vmem [shape: f32[2,16,16,4], index: 0, kind: input, shape index: {}, may-alias: {0,4}]
  %s1 = inlined_call_operand.vmem [shape: f32[4,12], index: 1, kind: input, shape index: {}]
  %s2 = inlined_call_operand.vmem [shape: f32[1,12], index: 2, kind: input, shape index: {}]
  %s3 = inlined_call_operand.<no memory space> [shape: f32[1], index: 3, kind: input, shape index: {}]
  %s4 = inlined_call_operand.vmem [shape: f32[2,16,16,4], index: 4, kind: output, shape index: {}, may-alias: {0,4}]
  %s5 = sld [smem:[#allocation0]]
  $region49: #{col_attention.1} parent=0
    _
  %s7 = ssub.s32 1, %s5
  %s8 = scalar_select 0, %s7, %s5
  %9 = sst [smem:[#allocation2]] %s3
  loop: start=0, step=1, limit=6
  $region2: #{col_attention.1} parent=0 // loop_pre_header
    _
  $region3: #{col_attention.1} parent=0 // loop_header
    %s11 = sphi 0, %s15
    %p12 = scmp.ge.s32.totalorder %s11, 6
    %s18 = sphi 0, %s30
    %s19 = sphi 0, %s26
    %s20 = sphi 0, %s18
    %s21 = sphi 0, %s19
    %s22 = sphi 0, %s20
    %s23 = sphi 0, %s21
    %s35 = sphi 0, %s37
    %s38 = sphi 0, %s35
    %s39 = sphi 0, %s38
    %s55 = sphi 0, %s39
    %s59 = sphi 0, %s59
    %s61 = sphi 0, %s59
    %s62 = sphi 0, %s61
    %s76 = sphi 0, %s62
    %s80 = sphi 0, %s80
    %s82 = sphi 0, %s80
    %s83 = sphi 0, %s82
    %s97 = sphi 0, %s83
    %s101 = sphi 0, %s101
    %s103 = sphi 0, %s101
    %s104 = sphi 0, %s103
    %s118 = sphi 0, %s104
    %s126 = sphi 0, %s128
    %s129 = sphi 0, %s126
    %s130 = sphi 0, %s129
    %s146 = sphi 0, %s130
  $region4: #{col_attention.1} parent=0 // loop_header_branch
    %14 = sbr.rel (%p12) target = $region8
  $region5: #{col_attention.1} parent=0 // loop_body
    %s16 = ssub.s32 %s11, 1
    %s17 = ssub.s32 %s11, 2
    %s24 = sadd.s32 1, %s19
    %p25 = scmp.ge.s32.totalorder %s24, 2
    %s26 = scalar_select %p25, 0, %s24
    %s27 = sadd.s32 1, %s18
    %s28 = scalar_select %p25, %s27, %s18
    %p29 = scmp.ge.s32.totalorder %s28, 2
    %s30 = scalar_select %p29, 0, %s28
    %s31 = ssub.s32 %s18, %s30
    %s32 = ssub.s32 %s19, %s26
    %s33 = sor.u32 %s31, %s32
    %p34 = scmp.eq.s32.totalorder %s33, 0
    %s36 = sadd.s32 %s35, 1
    %s37 = scalar_select %p34, %s35, %s36
    %p40 = pneg %p34
    %p41 = scmp.eq.s32.totalorder %s11, 3
    %p42 = por %p40, %p41
    %p43 = scmp.ne.s32.totalorder %s35, %s38
    %p44 = scmp.eq.s32.totalorder %s11, 0
    %p45 = por %p43, %p44
    %p46 = scmp.ne.s32.totalorder %s35, %s38
    %p47 = scmp.eq.s32.totalorder %s16, 3
    %p48 = por %p46, %p47
    %p49 = scmp.ne.s32.totalorder %s38, %s39
    %p50 = scmp.eq.s32.totalorder %s16, 0
    %p51 = por %p49, %p50
    %p52 = scmp.ne.s32.totalorder %s38, %s39
    %p53 = scmp.eq.s32.totalorder %s17, 3
    %p54 = por %p52, %p53
    %p56 = scmp.ne.s32.totalorder %s39, %s55
    %p57 = scmp.eq.s32.totalorder %s17, 0
    %p58 = por %p56, %p57
    %s60 = sadd.s32 %s59, 1
    %p63 = scmp.eq.s32.totalorder %s11, 3
    %p64 = scmp.ne.s32.totalorder %s59, %s61
    %p65 = scmp.eq.s32.totalorder %s11, 0
    %p66 = por %p64, %p65
    %p67 = scmp.ne.s32.totalorder %s59, %s61
    %p68 = scmp.eq.s32.totalorder %s16, 3
    %p69 = por %p67, %p68
    %p70 = scmp.ne.s32.totalorder %s61, %s62
    %p71 = scmp.eq.s32.totalorder %s16, 0
    %p72 = por %p70, %p71
    %p73 = scmp.ne.s32.totalorder %s61, %s62
    %p74 = scmp.eq.s32.totalorder %s17, 3
    %p75 = por %p73, %p74
    %p77 = scmp.ne.s32.totalorder %s62, %s76
    %p78 = scmp.eq.s32.totalorder %s17, 0
    %p79 = por %p77, %p78
    %s81 = sadd.s32 %s80, 1
    %p84 = scmp.eq.s32.totalorder %s11, 3
    %p85 = scmp.ne.s32.totalorder %s80, %s82
    %p86 = scmp.eq.s32.totalorder %s11, 0
    %p87 = por %p85, %p86
    %p88 = scmp.ne.s32.totalorder %s80, %s82
    %p89 = scmp.eq.s32.totalorder %s16, 3
    %p90 = por %p88, %p89
    %p91 = scmp.ne.s32.totalorder %s82, %s83
    %p92 = scmp.eq.s32.totalorder %s16, 0
    %p93 = por %p91, %p92
    %p94 = scmp.ne.s32.totalorder %s82, %s83
    %p95 = scmp.eq.s32.totalorder %s17, 3
    %p96 = por %p94, %p95
    %p98 = scmp.ne.s32.totalorder %s83, %s97
    %p99 = scmp.eq.s32.totalorder %s17, 0
    %p100 = por %p98, %p99
    %s102 = sadd.s32 %s101, 1
    %p105 = scmp.eq.s32.totalorder %s11, 3
    %p106 = scmp.ne.s32.totalorder %s101, %s103
    %p107 = scmp.eq.s32.totalorder %s11, 0
    %p108 = por %p106, %p107
    %p109 = scmp.ne.s32.totalorder %s101, %s103
    %p110 = scmp.eq.s32.totalorder %s16, 3
    %p111 = por %p109, %p110
    %p112 = scmp.ne.s32.totalorder %s103, %s104
    %p113 = scmp.eq.s32.totalorder %s16, 0
    %p114 = por %p112, %p113
    %p115 = scmp.ne.s32.totalorder %s103, %s104
    %p116 = scmp.eq.s32.totalorder %s17, 3
    %p117 = por %p115, %p116
    %p119 = scmp.ne.s32.totalorder %s104, %s118
    %p120 = scmp.eq.s32.totalorder %s17, 0
    %p121 = por %p119, %p120
    %s122 = ssub.s32 %s18, %s30
    %s123 = ssub.s32 %s19, %s26
    %s124 = sor.u32 %s122, %s123
    %p125 = scmp.eq.s32.totalorder %s124, 0
    %s127 = sadd.s32 %s126, 1
    %s128 = scalar_select %p125, %s126, %s127
    %p131 = pneg %p125
    %p132 = scmp.eq.s32.totalorder %s11, 3
    %p133 = por %p131, %p132
    %p134 = scmp.ne.s32.totalorder %s126, %s129
    %p135 = scmp.eq.s32.totalorder %s11, 0
    %p136 = por %p134, %p135
    %p137 = scmp.ne.s32.totalorder %s126, %s129
    %p138 = scmp.eq.s32.totalorder %s16, 3
    %p139 = por %p137, %p138
    %p140 = scmp.ne.s32.totalorder %s129, %s130
    %p141 = scmp.eq.s32.totalorder %s16, 0
    %p142 = por %p140, %p141
    %p143 = scmp.ne.s32.totalorder %s129, %s130
    %p144 = scmp.eq.s32.totalorder %s17, 3
    %p145 = por %p143, %p144
    %p147 = scmp.ne.s32.totalorder %s130, %s146
    %p148 = scmp.eq.s32.totalorder %s17, 0
    %p149 = por %p147, %p148
    %p150 = scmp.le.s32.totalorder 1, %s11
    %p151 = scmp.lt.s32.totalorder %s11, 5
    %p152 = pnand %p150, %p151
    %p153 = pneg %p152
    // Predicated region
    $region9: #{col_attention.1} parent=5 // pred_check
      _
    $region10: #{col_attention.1} parent=5 // pred_check_branch
      %155 = sbr.rel (%p152) target = $region12
    $region11: #{col_attention.1} parent=5 // pred_region
      %s156 = ssub.s32 %s11, 1
      // Predicated region
      $region13: #{col_attention.1} parent=11 // pred_check
        %p157 = pneg %p72
      $region14: #{col_attention.1} parent=11 // pred_check_branch
        %159 = sbr.rel (%p157) target = $region16
      $region15: #{col_attention.1} parent=11 // pred_region
        _
      $region16: #{col_attention.1} parent=11 // pred_fallthru
        _
      // Predicated region
      $region17: #{col_attention.1} parent=11 // pred_check
        %p160 = pneg %p93
      $region18: #{col_attention.1} parent=11 // pred_check_branch
        %162 = sbr.rel (%p160) target = $region20
      $region19: #{col_attention.1} parent=11 // pred_region
        _
      $region20: #{col_attention.1} parent=11 // pred_fallthru
        _
      // Predicated region
      $region21: #{col_attention.1} parent=11 // pred_check
        %p163 = pneg %p114
      $region22: #{col_attention.1} parent=11 // pred_check_branch
        %165 = sbr.rel (%p163) target = $region24
      $region23: #{col_attention.1} parent=11 // pred_region
        _
      $region24: #{col_attention.1} parent=11 // pred_fallthru
        _
    $region12: #{col_attention.1} parent=5 // pred_fallthru
      _
    %p166 = scmp.lt.s32.totalorder %s11, 4
    // Predicated region
    $region25: #{col_attention.1} parent=5 // pred_check
      %p167 = pneg %p166
    $region26: #{col_attention.1} parent=5 // pred_check_branch
      %169 = sbr.rel (%p167) target = $region28
    $region27: #{col_attention.1} parent=5 // pred_region
      // Predicated region
      $region29: #{col_attention.1} parent=27 // pred_check
        %p170 = pneg %p45
      $region30: #{col_attention.1} parent=27 // pred_check_branch
        %172 = sbr.rel (%p170) target = $region32
      $region31: #{col_attention.1} parent=27 // pred_region
        %s173 = smul.u32 8, %s19
        %p174 = scmp.lt.s32.totalorder %s18, 1
        %s175 = scalar_select %p174, %s18, 1
        %p176 = scmp.lt.s32.totalorder %s173, 15
        %s177 = scalar_select %p176, %s173, 15
        %s178 = smul.addr %s177, 2
        %s179 = smul.addr %s175, 32
        %s180 = sadd.s32 %s178, %s179
        %s181 = smul.addr %s180, 8
        %s182 = scalar_lea.vmem %s0, %s181
        %s183 = smul.u32 8, %s19
      $region32: #{col_attention.1} parent=27 // pred_fallthru
        _
    $region28: #{col_attention.1} parent=5 // pred_fallthru
      _
    %p184 = scmp.le.s32.totalorder 1, %s11
    %p185 = scmp.lt.s32.totalorder %s11, 5
    %p186 = pnand %p184, %p185
    %p187 = pneg %p186
    // Predicated region
    $region33: #{col_attention.1} parent=5 // pred_check
      _
    $region34: #{col_attention.1} parent=5 // pred_check_branch
      %189 = sbr.rel (%p186) target = $region36
    $region35: #{col_attention.1} parent=5 // pred_region
      %s190 = ssub.s32 %s11, 1
      %s191 = smul.u32 8, %s21
      %p192 = scmp.lt.s32.totalorder %s20, 1
      %s193 = scalar_select %p192, %s20, 1
      %p194 = scmp.lt.s32.totalorder %s191, 15
      %s195 = scalar_select %p194, %s191, 15
      %s196 = smul.addr %s195, 2
      %s197 = smul.addr %s193, 32
      %s198 = sadd.s32 %s196, %s197
      %s199 = smul.addr %s198, 8
      %s200 = scalar_lea.vmem %s0, %s199
      %p201 = pneg %p51
      %p202 = pneg %p48
      %p203 = pneg %p72
      %p204 = pneg %p69
      %p205 = pneg %p93
      %p206 = pneg %p90
      %p207 = pneg %p114
      %p208 = pneg %p111
      %p209 = pneg %p142
      %p210 = pneg %p139
      %s211 = smul.u32 8, %s21
      %p212 = scmp.lt.s32.totalorder %s20, 1
      %s213 = scalar_select %p212, %s20, 1
      %p214 = scmp.lt.s32.totalorder %s211, 15
      %s215 = scalar_select %p214, %s211, 15
      %s216 = smul.addr %s215, 2
      %s217 = smul.addr %s213, 32
      %s218 = sadd.s32 %s216, %s217
      %s219 = smul.addr %s218, 8
      %s220 = scalar_lea.vmem %s4, %s219
      %s221 = smul.u32 8, %s21
      %p222 = scmp.lt.s32.totalorder %s20, 1
      %s223 = scalar_select %p222, %s20, 1
      %p224 = scmp.lt.s32.totalorder %s221, 15
      %s225 = scalar_select %p224, %s221, 15
      %s226 = smul.addr %s225, 2
      %s227 = smul.addr %s223, 32
      %s228 = sadd.s32 %s226, %s227
      %s229 = smul.addr %s228, 8
      %s230 = scalar_lea.vmem %s0, %s229
      %s231 = smul.u32 8, %s21
      %s232 = smul.u32 8, %s21
      %p233 = scmp.lt.s32.totalorder %s20, 1
      %s234 = scalar_select %p233, %s20, 1
      %p235 = scmp.lt.s32.totalorder %s232, 15
      %s236 = scalar_select %p235, %s232, 15
      %s237 = smul.addr %s236, 2
      %s238 = smul.addr %s234, 32
      %s239 = sadd.s32 %s237, %s238
      %s240 = smul.addr %s239, 8
      %s241 = scalar_lea.vmem %s4, %s240
      %s242 = smul.u32 8, %s21
      %v243 = vld [vmem:[%s230] sm:$0xff]
      %v244 = vld [vmem:[%s230 + $0x8] sm:$0xff]
      %v245 = vld [vmem:[%s230 + $0x10] sm:$0xff]
      %v246 = vld [vmem:[%s230 + $0x18] sm:$0xff]
      %v247 = vld [vmem:[%s230 + $0x20] sm:$0xff]
      %v248 = vld [vmem:[%s230 + $0x28] sm:$0xff]
      %v249 = vld [vmem:[%s230 + $0x30] sm:$0xff]
      %v250 = vld [vmem:[%s230 + $0x38] sm:$0xff]
      %v251 = vld [vmem:[%s230 + $0x40] sm:$0xff]
      %v252 = vld [vmem:[%s230 + $0x48] sm:$0xff]
      %v253 = vld [vmem:[%s230 + $0x50] sm:$0xff]
      %v254 = vld [vmem:[%s230 + $0x58] sm:$0xff]
      %v255 = vld [vmem:[%s230 + $0x60] sm:$0xff]
      %v256 = vld [vmem:[%s230 + $0x68] sm:$0xff]
      %v257 = vld [vmem:[%s230 + $0x70] sm:$0xff]
      %v258 = vld [vmem:[%s230 + $0x78] sm:$0xff]
      %v259 = vld [vmem:[%s1] sm:$0xf]
      %v260 = vld [vmem:[%s2] sm:$0x1]
      %v262 = vlaneseq
      %v263 = vshrl.u32 %v262, 7
      %v264 = vsub.s32 0, %v263
      %v265 = vrot.slane %v260, %v264
      %vm267 = vcmask 31744
      %v269 = vsel %vm267, %v243, 0
      %v272 = vsel %vm267, %v244, 0
      %v275 = vsel %vm267, %v245, 0
      %v278 = vsel %vm267, %v246, 0
      %v281 = vsel %vm267, %v247, 0
      %v284 = vsel %vm267, %v248, 0
      %v287 = vsel %vm267, %v249, 0
      %v290 = vsel %vm267, %v250, 0
      %v293 = vsel %vm267, %v251, 0
      %v296 = vsel %vm267, %v252, 0
      %v299 = vsel %vm267, %v253, 0
      %v302 = vsel %vm267, %v254, 0
      %v305 = vsel %vm267, %v255, 0
      %v308 = vsel %vm267, %v256, 0
      %v311 = vsel %vm267, %v257, 0
      %v314 = vsel %vm267, %v258, 0
      %vm316 = vcmask 1043456
      %v318 = vsel %vm316, %v259, 0
      %320 = vmatprep.subr.mxu0 0.0
      %321 = vmatpush1.msra.mxu0 %v318
      %322 = vmatprep.subr.mxu0 0.0
      %323 = vmatpush1.msra.mxu0 0.0
      %324 = vmatprep.subr.mxu0 0.0
      %325 = vmatpush1.msra.mxu0 0.0
      %326 = vmatprep.subr.mxu0 0.0
      %327 = vmatpush1.msra.mxu0 0.0
      %328 = vmatprep.subr.mxu0 0.0
      %329 = vmatpush1.msra.mxu0 0.0
      %330 = vmatprep.subr.mxu0 0.0
      %331 = vmatpush1.msra.mxu0 0.0
      %332 = vmatprep.subr.mxu0 0.0
      %333 = vmatpush1.msra.mxu0 0.0
      %334 = vmatprep.subr.mxu0 0.0
      %335 = vmatpush1.msra.mxu0 0.0
      %336 = vmatprep.subr.mxu0 0.0
      %337 = vmatpush1.msra.mxu0 0.0
      %338 = vmatprep.subr.mxu0 0.0
      %339 = vmatpush1.msra.mxu0 0.0
      %340 = vmatprep.subr.mxu0 0.0
      %341 = vmatpush1.msra.mxu0 0.0
      %342 = vmatprep.subr.mxu0 0.0
      %343 = vmatpush1.msra.mxu0 0.0
      %344 = vmatprep.subr.mxu0 0.0
      %345 = vmatpush1.msra.mxu0 0.0
      %346 = vmatprep.subr.mxu0 0.0
      %347 = vmatpush1.msra.mxu0 0.0
      %348 = vmatprep.subr.mxu0 0.0
      %349 = vmatpush1.msra.mxu0 0.0
      %350 = vmatprep.subr.mxu0 0.0
      %351 = vmatpush1.msra.mxu0 0.0
      %352 = vmatprep.subr.mxu0 0.0
      %353 = vmatpush1.msra.mxu0 0.0
      %354 = vmatprep.subr.mxu0 0.0
      %355 = vmatpush1.msra.mxu0 0.0
      %356 = vmatprep.subr.mxu0 0.0
      %357 = vmatpush1.msra.mxu0 0.0
      %358 = vmatprep.subr.mxu0 0.0
      %359 = vmatpush1.msra.mxu0 0.0
      %360 = vmatprep.subr.mxu0 0.0
      %361 = vmatpush1.msra.mxu0 0.0
      %362 = vmatprep.subr.mxu0 0.0
      %363 = vmatpush1.msra.mxu0 0.0
      %364 = vmatprep.subr.mxu0 0.0
      %365 = vmatpush1.msra.mxu0 0.0
      %366 = vmatprep.subr.mxu0 0.0
      %367 = vmatpush1.msra.mxu0 0.0
      %368 = vmatprep.subr.mxu0 0.0
      %369 = vmatpush1.msra.mxu0 0.0
      %370 = vmatprep.subr.mxu0 0.0
      %371 = vmatpush1.msra.mxu0 0.0
      %372 = vmatprep.subr.mxu0 0.0
      %373 = vmatpush1.msra.mxu0 0.0
      %374 = vmatprep.subr.mxu0 0.0
      %375 = vmatpush1.msra.mxu0 0.0
      %376 = vmatprep.subr.mxu0 0.0
      %377 = vmatpush1.msra.mxu0 0.0
      %378 = vmatprep.subr.mxu0 0.0
      %379 = vmatpush1.msra.mxu0 0.0
      %380 = vmatprep.subr.mxu0 0.0
      %381 = vmatpush1.msra.mxu0 0.0
      %382 = vmatprep.subr.mxu0 0.0
      %383 = vmatpush1.msra.mxu0 0.0
      %384 = vmatprep.mubr.f32.mxu0 0.0
      %385 = vmatmul.mubr.f32.gmra.mrb[0].mxu0 %v269
      %v386 = vpop.f32.mrb[0].mxu0
      %v387 = vadd.f32 %v265, %v386
      %v388 = vpop.f32.mrb[0].mxu0
      %389 = vmatprep.mubr.f32.mxu0 0.0
      %390 = vmatmul.mubr.f32.gmra.mrb[0].mxu0 %v272
      %v391 = vpop.f32.mrb[0].mxu0
      %v392 = vadd.f32 %v265, %v391
      %v393 = vpop.f32.mrb[0].mxu0
      %394 = vmatprep.mubr.f32.mxu0 0.0
      %395 = vmatmul.mubr.f32.gmra.mrb[0].mxu0 %v275
      %v396 = vpop.f32.mrb[0].mxu0
      %v397 = vadd.f32 %v265, %v396
      %v398 = vpop.f32.mrb[0].mxu0
      %399 = vmatprep.mubr.f32.mxu0 0.0
      %400 = vmatmul.mubr.f32.gmra.mrb[0].mxu0 %v278
      %v401 = vpop.f32.mrb[0].mxu0
      %v402 = vadd.f32 %v265, %v401
      %v403 = vpop.f32.mrb[0].mxu0
      %404 = vmatprep.mubr.f32.mxu0 0.0
      %405 = vmatmul.mubr.f32.gmra.mrb[0].mxu0 %v281
      %v406 = vpop.f32.mrb[0].mxu0
      %v407 = vadd.f32 %v265, %v406
      %v408 = vpop.f32.mrb[0].mxu0
      %409 = vmatprep.mubr.f32.mxu0 0.0
      %410 = vmatmul.mubr.f32.gmra.mrb[0].mxu0 %v284
      %v411 = vpop.f32.mrb[0].mxu0
      %v412 = vadd.f32 %v265, %v411
      %v413 = vpop.f32.mrb[0].mxu0
      %414 = vmatprep.mubr.f32.mxu0 0.0
      %415 = vmatmul.mubr.f32.gmra.mrb[0].mxu0 %v287
      %v416 = vpop.f32.mrb[0].mxu0
      %v417 = vadd.f32 %v265, %v416
      %v418 = vpop.f32.mrb[0].mxu0
      %419 = vmatprep.mubr.f32.mxu0 0.0
      %420 = vmatmul.mubr.f32.gmra.mrb[0].mxu0 %v290
      %v421 = vpop.f32.mrb[0].mxu0
      %v422 = vadd.f32 %v265, %v421
      %v423 = vpop.f32.mrb[0].mxu0
      %424 = vmatprep.mubr.f32.mxu0 0.0
      %425 = vmatmul.mubr.f32.gmra.mrb[0].mxu0 %v293
      %v426 = vpop.f32.mrb[0].mxu0
      %v427 = vadd.f32 %v265, %v426
      %v428 = vpop.f32.mrb[0].mxu0
      %429 = vmatprep.mubr.f32.mxu0 0.0
      %430 = vmatmul.mubr.f32.gmra.mrb[0].mxu0 %v296
      %v431 = vpop.f32.mrb[0].mxu0
      %v432 = vadd.f32 %v265, %v431
      %v433 = vpop.f32.mrb[0].mxu0
      %434 = vmatprep.mubr.f32.mxu0 0.0
      %435 = vmatmul.mubr.f32.gmra.mrb[0].mxu0 %v299
      %v436 = vpop.f32.mrb[0].mxu0
      %v437 = vadd.f32 %v265, %v436
      %v438 = vpop.f32.mrb[0].mxu0
      %439 = vmatprep.mubr.f32.mxu0 0.0
      %440 = vmatmul.mubr.f32.gmra.mrb[0].mxu0 %v302
      %v441 = vpop.f32.mrb[0].mxu0
      %v442 = vadd.f32 %v265, %v441
      %v443 = vpop.f32.mrb[0].mxu0
      %444 = vmatprep.mubr.f32.mxu0 0.0
      %445 = vmatmul.mubr.f32.gmra.mrb[0].mxu0 %v305
      %v446 = vpop.f32.mrb[0].mxu0
      %v447 = vadd.f32 %v265, %v446
      %v448 = vpop.f32.mrb[0].mxu0
      %449 = vmatprep.mubr.f32.mxu0 0.0
      %450 = vmatmul.mubr.f32.gmra.mrb[0].mxu0 %v308
      %v451 = vpop.f32.mrb[0].mxu0
      %v452 = vadd.f32 %v265, %v451
      %v453 = vpop.f32.mrb[0].mxu0
      %454 = vmatprep.mubr.f32.mxu0 0.0
      %455 = vmatmul.mubr.f32.gmra.mrb[0].mxu0 %v311
      %v456 = vpop.f32.mrb[0].mxu0
      %v457 = vadd.f32 %v265, %v456
      %v458 = vpop.f32.mrb[0].mxu0
      %459 = vmatprep.mubr.f32.mxu0 0.0
      %460 = vmatmul.mubr.f32.gmra.mrb[0].mxu0 %v314
      %v461 = vpop.f32.mrb[0].mxu0
      %v462 = vadd.f32 %v265, %v461
      %v463 = vpop.f32.mrb[0].mxu0
      %464 = vdwg.mxu0
      %467 = vrot.lane.b32.xlu0 %v387, 124
      %v468 = vpop.permute.xlu0 %467
      %469 = vrot.lane.b32.xlu0 %v392, 124
      %v470 = vpop.permute.xlu0 %469
      %v471 = vsel %vm267, %v387, 0
      %v473 = vsel %vm267, %v392, 0
      %v475 = vsel %vm267, %v468, 0
      %v477 = vsel %vm267, %v470, 0
      %479 = vmatprep.subr.mxu0 0.0
      %480 = vmatpush1.xpose.msra.mxu0 %v475
      %481 = vmatprep.subr.mxu0 0.0
      %482 = vmatpush1.xpose.msra.mxu0 %v477
      %483 = vmatprep.subr.mxu0 0.0
      %484 = vmatpush1.xpose.msra.mxu0 0.0
      %485 = vmatprep.subr.mxu0 0.0
      %486 = vmatpush1.xpose.msra.mxu0 0.0
      %487 = vmatprep.subr.mxu0 0.0
      %488 = vmatpush1.xpose.msra.mxu0 0.0
      %489 = vmatprep.subr.mxu0 0.0
      %490 = vmatpush1.xpose.msra.mxu0 0.0
      %491 = vmatprep.subr.mxu0 0.0
      %492 = vmatpush1.xpose.msra.mxu0 0.0
      %493 = vmatprep.subr.mxu0 0.0
      %494 = vmatpush1.xpose.msra.mxu0 0.0
      %495 = vmatprep.subr.mxu0 0.0
      %496 = vmatpush1.xpose.msra.mxu0 0.0
      %497 = vmatprep.subr.mxu0 0.0
      %498 = vmatpush1.xpose.msra.mxu0 0.0
      %499 = vmatprep.subr.mxu0 0.0
      %500 = vmatpush1.xpose.msra.mxu0 0.0
      %501 = vmatprep.subr.mxu0 0.0
      %502 = vmatpush1.xpose.msra.mxu0 0.0
      %503 = vmatprep.subr.mxu0 0.0
      %504 = vmatpush1.xpose.msra.mxu0 0.0
      %505 = vmatprep.subr.mxu0 0.0
      %506 = vmatpush1.xpose.msra.mxu0 0.0
      %507 = vmatprep.subr.mxu0 0.0
      %508 = vmatpush1.xpose.msra.mxu0 0.0
      %509 = vmatprep.subr.mxu0 0.0
      %510 = vmatpush1.xpose.msra.mxu0 0.0
      %511 = vmatprep.subr.mxu0 0.0
      %512 = vmatpush1.xpose.msra.mxu0 0.0
      %513 = vmatprep.subr.mxu0 0.0
      %514 = vmatpush1.xpose.msra.mxu0 0.0
      %515 = vmatprep.subr.mxu0 0.0
      %516 = vmatpush1.xpose.msra.mxu0 0.0
      %517 = vmatprep.subr.mxu0 0.0
      %518 = vmatpush1.xpose.msra.mxu0 0.0
      %519 = vmatprep.subr.mxu0 0.0
      %520 = vmatpush1.xpose.msra.mxu0 0.0
      %521 = vmatprep.subr.mxu0 0.0
      %522 = vmatpush1.xpose.msra.mxu0 0.0
      %523 = vmatprep.subr.mxu0 0.0
      %524 = vmatpush1.xpose.msra.mxu0 0.0
      %525 = vmatprep.subr.mxu0 0.0
      %526 = vmatpush1.xpose.msra.mxu0 0.0
      %527 = vmatprep.subr.mxu0 0.0
      %528 = vmatpush1.xpose.msra.mxu0 0.0
      %529 = vmatprep.subr.mxu0 0.0
      %530 = vmatpush1.xpose.msra.mxu0 0.0
      %531 = vmatprep.subr.mxu0 0.0
      %532 = vmatpush1.xpose.msra.mxu0 0.0
      %533 = vmatprep.subr.mxu0 0.0
      %534 = vmatpush1.xpose.msra.mxu0 0.0
      %535 = vmatprep.subr.mxu0 0.0
      %536 = vmatpush1.xpose.msra.mxu0 0.0
      %537 = vmatprep.subr.mxu0 0.0
      %538 = vmatpush1.xpose.msra.mxu0 0.0
      %539 = vmatprep.subr.mxu0 0.0
      %540 = vmatpush1.xpose.msra.mxu0 0.0
      %541 = vmatprep.subr.mxu0 0.0
      %542 = vmatpush1.xpose.msra.mxu0 0.0
      %543 = vmatprep.mubr.f32.mxu0 0.0
      %544 = vmatmul.mubr.f32.gmra.mrb[0].mxu0 %v471
      %v545 = vpop.f32.mrb[0].mxu0
      %v546 = vadd.f32 0.0, %v545
      %v547 = vpop.f32.mrb[0].mxu0
      %548 = vmatprep.mubr.f32.mxu0 0.0
      %549 = vmatmul.mubr.f32.gmra.mrb[0].mxu0 %v473
      %v550 = vpop.f32.mrb[0].mxu0
      %v551 = vadd.f32 0.0, %v550
      %v552 = vpop.f32.mrb[0].mxu0
      %553 = vdwg.mxu0
      %556 = vrot.lane.b32.xlu0 %v397, 124
      %v557 = vpop.permute.xlu0 %556
      %558 = vrot.lane.b32.xlu0 %v402, 124
      %v559 = vpop.permute.xlu0 %558
      %v560 = vsel %vm267, %v397, 0
      %v562 = vsel %vm267, %v402, 0
      %v564 = vsel %vm267, %v557, 0
      %v566 = vsel %vm267, %v559, 0
      %568 = vmatprep.subr.mxu0 0.0
      %569 = vmatpush1.xpose.msra.mxu0 %v564
      %570 = vmatprep.subr.mxu0 0.0
      %571 = vmatpush1.xpose.msra.mxu0 %v566
      %572 = vmatprep.subr.mxu0 0.0
      %573 = vmatpush1.xpose.msra.mxu0 0.0
      %574 = vmatprep.subr.mxu0 0.0
      %575 = vmatpush1.xpose.msra.mxu0 0.0
      %576 = vmatprep.subr.mxu0 0.0
      %577 = vmatpush1.xpose.msra.mxu0 0.0
      %578 = vmatprep.subr.mxu0 0.0
      %579 = vmatpush1.xpose.msra.mxu0 0.0
      %580 = vmatprep.subr.mxu0 0.0
      %581 = vmatpush1.xpose.msra.mxu0 0.0
      %582 = vmatprep.subr.mxu0 0.0
      %583 = vmatpush1.xpose.msra.mxu0 0.0
      %584 = vmatprep.subr.mxu0 0.0
      %585 = vmatpush1.xpose.msra.mxu0 0.0
      %586 = vmatprep.subr.mxu0 0.0
      %587 = vmatpush1.xpose.msra.mxu0 0.0
      %588 = vmatprep.subr.mxu0 0.0
      %589 = vmatpush1.xpose.msra.mxu0 0.0
      %590 = vmatprep.subr.mxu0 0.0
      %591 = vmatpush1.xpose.msra.mxu0 0.0
      %592 = vmatprep.subr.mxu0 0.0
      %593 = vmatpush1.xpose.msra.mxu0 0.0
      %594 = vmatprep.subr.mxu0 0.0
      %595 = vmatpush1.xpose.msra.mxu0 0.0
      %596 = vmatprep.subr.mxu0 0.0
      %597 = vmatpush1.xpose.msra.mxu0 0.0
      %598 = vmatprep.subr.mxu0 0.0
      %599 = vmatpush1.xpose.msra.mxu0 0.0
      %600 = vmatprep.subr.mxu0 0.0
      %601 = vmatpush1.xpose.msra.mxu0 0.0
      %602 = vmatprep.subr.mxu0 0.0
      %603 = vmatpush1.xpose.msra.mxu0 0.0
      %604 = vmatprep.subr.mxu0 0.0
      %605 = vmatpush1.xpose.msra.mxu0 0.0
      %606 = vmatprep.subr.mxu0 0.0
      %607 = vmatpush1.xpose.msra.mxu0 0.0
      %608 = vmatprep.subr.mxu0 0.0
      %609 = vmatpush1.xpose.msra.mxu0 0.0
      %610 = vmatprep.subr.mxu0 0.0
      %611 = vmatpush1.xpose.msra.mxu0 0.0
      %612 = vmatprep.subr.mxu0 0.0
      %613 = vmatpush1.xpose.msra.mxu0 0.0
      %614 = vmatprep.subr.mxu0 0.0
      %615 = vmatpush1.xpose.msra.mxu0 0.0
      %616 = vmatprep.subr.mxu0 0.0
      %617 = vmatpush1.xpose.msra.mxu0 0.0
      %618 = vmatprep.subr.mxu0 0.0
      %619 = vmatpush1.xpose.msra.mxu0 0.0
      %620 = vmatprep.subr.mxu0 0.0
      %621 = vmatpush1.xpose.msra.mxu0 0.0
      %622 = vmatprep.subr.mxu0 0.0
      %623 = vmatpush1.xpose.msra.mxu0 0.0
      %624 = vmatprep.subr.mxu0 0.0
      %625 = vmatpush1.xpose.msra.mxu0 0.0
      %626 = vmatprep.subr.mxu0 0.0
      %627 = vmatpush1.xpose.msra.mxu0 0.0
      %628 = vmatprep.subr.mxu0 0.0
      %629 = vmatpush1.xpose.msra.mxu0 0.0
      %630 = vmatprep.subr.mxu0 0.0
      %631 = vmatpush1.xpose.msra.mxu0 0.0
      %632 = vmatprep.mubr.f32.mxu0 0.0
      %633 = vmatmul.mubr.f32.gmra.mrb[0].mxu0 %v560
      %v634 = vpop.f32.mrb[0].mxu0
      %v635 = vadd.f32 0.0, %v634
      %v636 = vpop.f32.mrb[0].mxu0
      %637 = vmatprep.mubr.f32.mxu0 0.0
      %638 = vmatmul.mubr.f32.gmra.mrb[0].mxu0 %v562
      %v639 = vpop.f32.mrb[0].mxu0
      %v640 = vadd.f32 0.0, %v639
      %v641 = vpop.f32.mrb[0].mxu0
      %642 = vdwg.mxu0
      %645 = vrot.lane.b32.xlu0 %v407, 124
      %v646 = vpop.permute.xlu0 %645
      %647 = vrot.lane.b32.xlu0 %v412, 124
      %v648 = vpop.permute.xlu0 %647
      %v649 = vsel %vm267, %v407, 0
      %v651 = vsel %vm267, %v412, 0
      %v653 = vsel %vm267, %v646, 0
      %v655 = vsel %vm267, %v648, 0
      %657 = vmatprep.subr.mxu0 0.0
      %658 = vmatpush1.xpose.msra.mxu0 %v653
      %659 = vmatprep.subr.mxu0 0.0
      %660 = vmatpush1.xpose.msra.mxu0 %v655
      %661 = vmatprep.subr.mxu0 0.0
      %662 = vmatpush1.xpose.msra.mxu0 0.0
      %663 = vmatprep.subr.mxu0 0.0
      %664 = vmatpush1.xpose.msra.mxu0 0.0
      %665 = vmatprep.subr.mxu0 0.0
      %666 = vmatpush1.xpose.msra.mxu0 0.0
      %667 = vmatprep.subr.mxu0 0.0
      %668 = vmatpush1.xpose.msra.mxu0 0.0
      %669 = vmatprep.subr.mxu0 0.0
      %670 = vmatpush1.xpose.msra.mxu0 0.0
      %671 = vmatprep.subr.mxu0 0.0
      %672 = vmatpush1.xpose.msra.mxu0 0.0
      %673 = vmatprep.subr.mxu0 0.0
      %674 = vmatpush1.xpose.msra.mxu0 0.0
      %675 = vmatprep.subr.mxu0 0.0
      %676 = vmatpush1.xpose.msra.mxu0 0.0
      %677 = vmatprep.subr.mxu0 0.0
      %678 = vmatpush1.xpose.msra.mxu0 0.0
      %679 = vmatprep.subr.mxu0 0.0
      %680 = vmatpush1.xpose.msra.mxu0 0.0
      %681 = vmatprep.subr.mxu0 0.0
      %682 = vmatpush1.xpose.msra.mxu0 0.0
      %683 = vmatprep.subr.mxu0 0.0
      %684 = vmatpush1.xpose.msra.mxu0 0.0
      %685 = vmatprep.subr.mxu0 0.0
      %686 = vmatpush1.xpose.msra.mxu0 0.0
      %687 = vmatprep.subr.mxu0 0.0
      %688 = vmatpush1.xpose.msra.mxu0 0.0
      %689 = vmatprep.subr.mxu0 0.0
      %690 = vmatpush1.xpose.msra.mxu0 0.0
      %691 = vmatprep.subr.mxu0 0.0
      %692 = vmatpush1.xpose.msra.mxu0 0.0
      %693 = vmatprep.subr.mxu0 0.0
      %694 = vmatpush1.xpose.msra.mxu0 0.0
      %695 = vmatprep.subr.mxu0 0.0
      %696 = vmatpush1.xpose.msra.mxu0 0.0
      %697 = vmatprep.subr.mxu0 0.0
      %698 = vmatpush1.xpose.msra.mxu0 0.0
      %699 = vmatprep.subr.mxu0 0.0
      %700 = vmatpush1.xpose.msra.mxu0 0.0
      %701 = vmatprep.subr.mxu0 0.0
      %702 = vmatpush1.xpose.msra.mxu0 0.0
      %703 = vmatprep.subr.mxu0 0.0
      %704 = vmatpush1.xpose.msra.mxu0 0.0
      %705 = vmatprep.subr.mxu0 0.0
      %706 = vmatpush1.xpose.msra.mxu0 0.0
      %707 = vmatprep.subr.mxu0 0.0
      %708 = vmatpush1.xpose.msra.mxu0 0.0
      %709 = vmatprep.subr.mxu0 0.0
      %710 = vmatpush1.xpose.msra.mxu0 0.0
      %711 = vmatprep.subr.mxu0 0.0
      %712 = vmatpush1.xpose.msra.mxu0 0.0
      %713 = vmatprep.subr.mxu0 0.0
      %714 = vmatpush1.xpose.msra.mxu0 0.0
      %715 = vmatprep.subr.mxu0 0.0
      %716 = vmatpush1.xpose.msra.mxu0 0.0
      %717 = vmatprep.subr.mxu0 0.0
      %718 = vmatpush1.xpose.msra.mxu0 0.0
      %719 = vmatprep.subr.mxu0 0.0
      %720 = vmatpush1.xpose.msra.mxu0 0.0
      %721 = vmatprep.mubr.f32.mxu0 0.0
      %722 = vmatmul.mubr.f32.gmra.mrb[0].mxu0 %v649
      %v723 = vpop.f32.mrb[0].mxu0
      %v724 = vadd.f32 0.0, %v723
      %v725 = vpop.f32.mrb[0].mxu0
      %726 = vmatprep.mubr.f32.mxu0 0.0
      %727 = vmatmul.mubr.f32.gmra.mrb[0].mxu0 %v651
      %v728 = vpop.f32.mrb[0].mxu0
      %v729 = vadd.f32 0.0, %v728
      %v730 = vpop.f32.mrb[0].mxu0
      %731 = vdwg.mxu0
      %734 = vrot.lane.b32.xlu0 %v417, 124
      %v735 = vpop.permute.xlu0 %734
      %736 = vrot.lane.b32.xlu0 %v422, 124
      %v737 = vpop.permute.xlu0 %736
      %v738 = vsel %vm267, %v417, 0
      %v740 = vsel %vm267, %v422, 0
      %v742 = vsel %vm267, %v735, 0
      %v744 = vsel %vm267, %v737, 0
      %746 = vmatprep.subr.mxu0 0.0
      %747 = vmatpush1.xpose.msra.mxu0 %v742
      %748 = vmatprep.subr.mxu0 0.0
      %749 = vmatpush1.xpose.msra.mxu0 %v744
      %750 = vmatprep.subr.mxu0 0.0
      %751 = vmatpush1.xpose.msra.mxu0 0.0
      %752 = vmatprep.subr.mxu0 0.0
      %753 = vmatpush1.xpose.msra.mxu0 0.0
      %754 = vmatprep.subr.mxu0 0.0
      %755 = vmatpush1.xpose.msra.mxu0 0.0
      %756 = vmatprep.subr.mxu0 0.0
      %757 = vmatpush1.xpose.msra.mxu0 0.0
      %758 = vmatprep.subr.mxu0 0.0
      %759 = vmatpush1.xpose.msra.mxu0 0.0
      %760 = vmatprep.subr.mxu0 0.0
      %761 = vmatpush1.xpose.msra.mxu0 0.0
      %762 = vmatprep.subr.mxu0 0.0
      %763 = vmatpush1.xpose.msra.mxu0 0.0
      %764 = vmatprep.subr.mxu0 0.0
      %765 = vmatpush1.xpose.msra.mxu0 0.0
      %766 = vmatprep.subr.mxu0 0.0
      %767 = vmatpush1.xpose.msra.mxu0 0.0
      %768 = vmatprep.subr.mxu0 0.0
      %769 = vmatpush1.xpose.msra.mxu0 0.0
      %770 = vmatprep.subr.mxu0 0.0
      %771 = vmatpush1.xpose.msra.mxu0 0.0
      %772 = vmatprep.subr.mxu0 0.0
      %773 = vmatpush1.xpose.msra.mxu0 0.0
      %774 = vmatprep.subr.mxu0 0.0
      %775 = vmatpush1.xpose.msra.mxu0 0.0
      %776 = vmatprep.subr.mxu0 0.0
      %777 = vmatpush1.xpose.msra.mxu0 0.0
      %778 = vmatprep.subr.mxu0 0.0
      %779 = vmatpush1.xpose.msra.mxu0 0.0
      %780 = vmatprep.subr.mxu0 0.0
      %781 = vmatpush1.xpose.msra.mxu0 0.0
      %782 = vmatprep.subr.mxu0 0.0
      %783 = vmatpush1.xpose.msra.mxu0 0.0
      %784 = vmatprep.subr.mxu0 0.0
      %785 = vmatpush1.xpose.msra.mxu0 0.0
      %786 = vmatprep.subr.mxu0 0.0
      %787 = vmatpush1.xpose.msra.mxu0 0.0
      %788 = vmatprep.subr.mxu0 0.0
      %789 = vmatpush1.xpose.msra.mxu0 0.0
      %790 = vmatprep.subr.mxu0 0.0
      %791 = vmatpush1.xpose.msra.mxu0 0.0
      %792 = vmatprep.subr.mxu0 0.0
      %793 = vmatpush1.xpose.msra.mxu0 0.0
      %794 = vmatprep.subr.mxu0 0.0
      %795 = vmatpush1.xpose.msra.mxu0 0.0
      %796 = vmatprep.subr.mxu0 0.0
      %797 = vmatpush1.xpose.msra.mxu0 0.0
      %798 = vmatprep.subr.mxu0 0.0
      %799 = vmatpush1.xpose.msra.mxu0 0.0
      %800 = vmatprep.subr.mxu0 0.0
      %801 = vmatpush1.xpose.msra.mxu0 0.0
      %802 = vmatprep.subr.mxu0 0.0
      %803 = vmatpush1.xpose.msra.mxu0 0.0
      %804 = vmatprep.subr.mxu0 0.0
      %805 = vmatpush1.xpose.msra.mxu0 0.0
      %806 = vmatprep.subr.mxu0 0.0
      %807 = vmatpush1.xpose.msra.mxu0 0.0
      %808 = vmatprep.subr.mxu0 0.0
      %809 = vmatpush1.xpose.msra.mxu0 0.0
      %810 = vmatprep.mubr.f32.mxu0 0.0
      %811 = vmatmul.mubr.f32.gmra.mrb[0].mxu0 %v738
      %v812 = vpop.f32.mrb[0].mxu0
      %v813 = vadd.f32 0.0, %v812
      %v814 = vpop.f32.mrb[0].mxu0
      %815 = vmatprep.mubr.f32.mxu0 0.0
      %816 = vmatmul.mubr.f32.gmra.mrb[0].mxu0 %v740
      %v817 = vpop.f32.mrb[0].mxu0
      %v818 = vadd.f32 0.0, %v817
      %v819 = vpop.f32.mrb[0].mxu0
      %820 = vdwg.mxu0
      %823 = vrot.lane.b32.xlu0 %v427, 124
      %v824 = vpop.permute.xlu0 %823
      %825 = vrot.lane.b32.xlu0 %v432, 124
      %v826 = vpop.permute.xlu0 %825
      %v827 = vsel %vm267, %v427, 0
      %v829 = vsel %vm267, %v432, 0
      %v831 = vsel %vm267, %v824, 0
      %v833 = vsel %vm267, %v826, 0
      %835 = vmatprep.subr.mxu0 0.0
      %836 = vmatpush1.xpose.msra.mxu0 %v831
      %837 = vmatprep.subr.mxu0 0.0
      %838 = vmatpush1.xpose.msra.mxu0 %v833
      %839 = vmatprep.subr.mxu0 0.0
      %840 = vmatpush1.xpose.msra.mxu0 0.0
      %841 = vmatprep.subr.mxu0 0.0
      %842 = vmatpush1.xpose.msra.mxu0 0.0
      %843 = vmatprep.subr.mxu0 0.0
      %844 = vmatpush1.xpose.msra.mxu0 0.0
      %845 = vmatprep.subr.mxu0 0.0
      %846 = vmatpush1.xpose.msra.mxu0 0.0
      %847 = vmatprep.subr.mxu0 0.0
      %848 = vmatpush1.xpose.msra.mxu0 0.0
      %849 = vmatprep.subr.mxu0 0.0
      %850 = vmatpush1.xpose.msra.mxu0 0.0
      %851 = vmatprep.subr.mxu0 0.0
      %852 = vmatpush1.xpose.msra.mxu0 0.0
      %853 = vmatprep.subr.mxu0 0.0
      %854 = vmatpush1.xpose.msra.mxu0 0.0
      %855 = vmatprep.subr.mxu0 0.0
      %856 = vmatpush1.xpose.msra.mxu0 0.0
      %857 = vmatprep.subr.mxu0 0.0
      %858 = vmatpush1.xpose.msra.mxu0 0.0
      %859 = vmatprep.subr.mxu0 0.0
      %860 = vmatpush1.xpose.msra.mxu0 0.0
      %861 = vmatprep.subr.mxu0 0.0
      %862 = vmatpush1.xpose.msra.mxu0 0.0
      %863 = vmatprep.subr.mxu0 0.0
      %864 = vmatpush1.xpose.msra.mxu0 0.0
      %865 = vmatprep.subr.mxu0 0.0
      %866 = vmatpush1.xpose.msra.mxu0 0.0
      %867 = vmatprep.subr.mxu0 0.0
      %868 = vmatpush1.xpose.msra.mxu0 0.0
      %869 = vmatprep.subr.mxu0 0.0
      %870 = vmatpush1.xpose.msra.mxu0 0.0
      %871 = vmatprep.subr.mxu0 0.0
      %872 = vmatpush1.xpose.msra.mxu0 0.0
      %873 = vmatprep.subr.mxu0 0.0
      %874 = vmatpush1.xpose.msra.mxu0 0.0
      %875 = vmatprep.subr.mxu0 0.0
      %876 = vmatpush1.xpose.msra.mxu0 0.0
      %877 = vmatprep.subr.mxu0 0.0
      %878 = vmatpush1.xpose.msra.mxu0 0.0
      %879 = vmatprep.subr.mxu0 0.0
      %880 = vmatpush1.xpose.msra.mxu0 0.0
      %881 = vmatprep.subr.mxu0 0.0
      %882 = vmatpush1.xpose.msra.mxu0 0.0
      %883 = vmatprep.subr.mxu0 0.0
      %884 = vmatpush1.xpose.msra.mxu0 0.0
      %885 = vmatprep.subr.mxu0 0.0
      %886 = vmatpush1.xpose.msra.mxu0 0.0
      %887 = vmatprep.subr.mxu0 0.0
      %888 = vmatpush1.xpose.msra.mxu0 0.0
      %889 = vmatprep.subr.mxu0 0.0
      %890 = vmatpush1.xpose.msra.mxu0 0.0
      %891 = vmatprep.subr.mxu0 0.0
      %892 = vmatpush1.xpose.msra.mxu0 0.0
      %893 = vmatprep.subr.mxu0 0.0
      %894 = vmatpush1.xpose.msra.mxu0 0.0
      %895 = vmatprep.subr.mxu0 0.0
      %896 = vmatpush1.xpose.msra.mxu0 0.0
      %897 = vmatprep.subr.mxu0 0.0
      %898 = vmatpush1.xpose.msra.mxu0 0.0
      %899 = vmatprep.mubr.f32.mxu0 0.0
      %900 = vmatmul.mubr.f32.gmra.mrb[0].mxu0 %v827
      %v901 = vpop.f32.mrb[0].mxu0
      %v902 = vadd.f32 0.0, %v901
      %v903 = vpop.f32.mrb[0].mxu0
      %904 = vmatprep.mubr.f32.mxu0 0.0
      %905 = vmatmul.mubr.f32.gmra.mrb[0].mxu0 %v829
      %v906 = vpop.f32.mrb[0].mxu0
      %v907 = vadd.f32 0.0, %v906
      %v908 = vpop.f32.mrb[0].mxu0
      %909 = vdwg.mxu0
      %912 = vrot.lane.b32.xlu0 %v437, 124
      %v913 = vpop.permute.xlu0 %912
      %914 = vrot.lane.b32.xlu0 %v442, 124
      %v915 = vpop.permute.xlu0 %914
      %v916 = vsel %vm267, %v437, 0
      %v918 = vsel %vm267, %v442, 0
      %v920 = vsel %vm267, %v913, 0
      %v922 = vsel %vm267, %v915, 0
      %924 = vmatprep.subr.mxu0 0.0
      %925 = vmatpush1.xpose.msra.mxu0 %v920
      %926 = vmatprep.subr.mxu0 0.0
      %927 = vmatpush1.xpose.msra.mxu0 %v922
      %928 = vmatprep.subr.mxu0 0.0
      %929 = vmatpush1.xpose.msra.mxu0 0.0
      %930 = vmatprep.subr.mxu0 0.0
      %931 = vmatpush1.xpose.msra.mxu0 0.0
      %932 = vmatprep.subr.mxu0 0.0
      %933 = vmatpush1.xpose.msra.mxu0 0.0
      %934 = vmatprep.subr.mxu0 0.0
      %935 = vmatpush1.xpose.msra.mxu0 0.0
      %936 = vmatprep.subr.mxu0 0.0
      %937 = vmatpush1.xpose.msra.mxu0 0.0
      %938 = vmatprep.subr.mxu0 0.0
      %939 = vmatpush1.xpose.msra.mxu0 0.0
      %940 = vmatprep.subr.mxu0 0.0
      %941 = vmatpush1.xpose.msra.mxu0 0.0
      %942 = vmatprep.subr.mxu0 0.0
      %943 = vmatpush1.xpose.msra.mxu0 0.0
      %944 = vmatprep.subr.mxu0 0.0
      %945 = vmatpush1.xpose.msra.mxu0 0.0
      %946 = vmatprep.subr.mxu0 0.0
      %947 = vmatpush1.xpose.msra.mxu0 0.0
      %948 = vmatprep.subr.mxu0 0.0
      %949 = vmatpush1.xpose.msra.mxu0 0.0
      %950 = vmatprep.subr.mxu0 0.0
      %951 = vmatpush1.xpose.msra.mxu0 0.0
      %952 = vmatprep.subr.mxu0 0.0
      %953 = vmatpush1.xpose.msra.mxu0 0.0
      %954 = vmatprep.subr.mxu0 0.0
      %955 = vmatpush1.xpose.msra.mxu0 0.0
      %956 = vmatprep.subr.mxu0 0.0
      %957 = vmatpush1.xpose.msra.mxu0 0.0
      %958 = vmatprep.subr.mxu0 0.0
      %959 = vmatpush1.xpose.msra.mxu0 0.0
      %960 = vmatprep.subr.mxu0 0.0
      %961 = vmatpush1.xpose.msra.mxu0 0.0
      %962 = vmatprep.subr.mxu0 0.0
      %963 = vmatpush1.xpose.msra.mxu0 0.0
      %964 = vmatprep.subr.mxu0 0.0
      %965 = vmatpush1.xpose.msra.mxu0 0.0
      %966 = vmatprep.subr.mxu0 0.0
      %967 = vmatpush1.xpose.msra.mxu0 0.0
      %968 = vmatprep.subr.mxu0 0.0
      %969 = vmatpush1.xpose.msra.mxu0 0.0
      %970 = vmatprep.subr.mxu0 0.0
      %971 = vmatpush1.xpose.msra.mxu0 0.0
      %972 = vmatprep.subr.mxu0 0.0
      %973 = vmatpush1.xpose.msra.mxu0 0.0
      %974 = vmatprep.subr.mxu0 0.0
      %975 = vmatpush1.xpose.msra.mxu0 0.0
      %976 = vmatprep.subr.mxu0 0.0
      %977 = vmatpush1.xpose.msra.mxu0 0.0
      %978 = vmatprep.subr.mxu0 0.0
      %979 = vmatpush1.xpose.msra.mxu0 0.0
      %980 = vmatprep.subr.mxu0 0.0
      %981 = vmatpush1.xpose.msra.mxu0 0.0
      %982 = vmatprep.subr.mxu0 0.0
      %983 = vmatpush1.xpose.msra.mxu0 0.0
      %984 = vmatprep.subr.mxu0 0.0
      %985 = vmatpush1.xpose.msra.mxu0 0.0
      %986 = vmatprep.subr.mxu0 0.0
      %987 = vmatpush1.xpose.msra.mxu0 0.0
      %988 = vmatprep.mubr.f32.mxu0 0.0
      %989 = vmatmul.mubr.f32.gmra.mrb[0].mxu0 %v916
      %v990 = vpop.f32.mrb[0].mxu0
      %v991 = vadd.f32 0.0, %v990
      %v992 = vpop.f32.mrb[0].mxu0
      %993 = vmatprep.mubr.f32.mxu0 0.0
      %994 = vmatmul.mubr.f32.gmra.mrb[0].mxu0 %v918
      %v995 = vpop.f32.mrb[0].mxu0
      %v996 = vadd.f32 0.0, %v995
      %v997 = vpop.f32.mrb[0].mxu0
      %998 = vdwg.mxu0
      %1001 = vrot.lane.b32.xlu0 %v447, 124
      %v1002 = vpop.permute.xlu0 %1001
      %1003 = vrot.lane.b32.xlu0 %v452, 124
      %v1004 = vpop.permute.xlu0 %1003
      %v1005 = vsel %vm267, %v447, 0
      %v1007 = vsel %vm267, %v452, 0
      %v1009 = vsel %vm267, %v1002, 0
      %v1011 = vsel %vm267, %v1004, 0
      %1013 = vmatprep.subr.mxu0 0.0
      %1014 = vmatpush1.xpose.msra.mxu0 %v1009
      %1015 = vmatprep.subr.mxu0 0.0
      %1016 = vmatpush1.xpose.msra.mxu0 %v1011
      %1017 = vmatprep.subr.mxu0 0.0
      %1018 = vmatpush1.xpose.msra.mxu0 0.0
      %1019 = vmatprep.subr.mxu0 0.0
      %1020 = vmatpush1.xpose.msra.mxu0 0.0
      %1021 = vmatprep.subr.mxu0 0.0
      %1022 = vmatpush1.xpose.msra.mxu0 0.0
      %1023 = vmatprep.subr.mxu0 0.0
      %1024 = vmatpush1.xpose.msra.mxu0 0.0
      %1025 = vmatprep.subr.mxu0 0.0
      %1026 = vmatpush1.xpose.msra.mxu0 0.0
      %1027 = vmatprep.subr.mxu0 0.0
      %1028 = vmatpush1.xpose.msra.mxu0 0.0
      %1029 = vmatprep.subr.mxu0 0.0
      %1030 = vmatpush1.xpose.msra.mxu0 0.0
      %1031 = vmatprep.subr.mxu0 0.0
      %1032 = vmatpush1.xpose.msra.mxu0 0.0
      %1033 = vmatprep.subr.mxu0 0.0
      %1034 = vmatpush1.xpose.msra.mxu0 0.0
      %1035 = vmatprep.subr.mxu0 0.0
      %1036 = vmatpush1.xpose.msra.mxu0 0.0
      %1037 = vmatprep.subr.mxu0 0.0
      %1038 = vmatpush1.xpose.msra.mxu0 0.0
      %1039 = vmatprep.subr.mxu0 0.0
      %1040 = vmatpush1.xpose.msra.mxu0 0.0
      %1041 = vmatprep.subr.mxu0 0.0
      %1042 = vmatpush1.xpose.msra.mxu0 0.0
      %1043 = vmatprep.subr.mxu0 0.0
      %1044 = vmatpush1.xpose.msra.mxu0 0.0
      %1045 = vmatprep.subr.mxu0 0.0
      %1046 = vmatpush1.xpose.msra.mxu0 0.0
      %1047 = vmatprep.subr.mxu0 0.0
      %1048 = vmatpush1.xpose.msra.mxu0 0.0
      %1049 = vmatprep.subr.mxu0 0.0
      %1050 = vmatpush1.xpose.msra.mxu0 0.0
      %1051 = vmatprep.subr.mxu0 0.0
      %1052 = vmatpush1.xpose.msra.mxu0 0.0
      %1053 = vmatprep.subr.mxu0 0.0
      %1054 = vmatpush1.xpose.msra.mxu0 0.0
      %1055 = vmatprep.subr.mxu0 0.0
      %1056 = vmatpush1.xpose.msra.mxu0 0.0
      %1057 = vmatprep.subr.mxu0 0.0
      %1058 = vmatpush1.xpose.msra.mxu0 0.0
      %1059 = vmatprep.subr.mxu0 0.0
      %1060 = vmatpush1.xpose.msra.mxu0 0.0
      %1061 = vmatprep.subr.mxu0 0.0
      %1062 = vmatpush1.xpose.msra.mxu0 0.0
      %1063 = vmatprep.subr.mxu0 0.0
      %1064 = vmatpush1.xpose.msra.mxu0 0.0
      %1065 = vmatprep.subr.mxu0 0.0
      %1066 = vmatpush1.xpose.msra.mxu0 0.0
      %1067 = vmatprep.subr.mxu0 0.0
      %1068 = vmatpush1.xpose.msra.mxu0 0.0
      %1069 = vmatprep.subr.mxu0 0.0
      %1070 = vmatpush1.xpose.msra.mxu0 0.0
      %1071 = vmatprep.subr.mxu0 0.0
      %1072 = vmatpush1.xpose.msra.mxu0 0.0
      %1073 = vmatprep.subr.mxu0 0.0
      %1074 = vmatpush1.xpose.msra.mxu0 0.0
      %1075 = vmatprep.subr.mxu0 0.0
      %1076 = vmatpush1.xpose.msra.mxu0 0.0
      %1077 = vmatprep.mubr.f32.mxu0 0.0
      %1078 = vmatmul.mubr.f32.gmra.mrb[0].mxu0 %v1005
      %v1079 = vpop.f32.mrb[0].mxu0
      %v1080 = vadd.f32 0.0, %v1079
      %v1081 = vpop.f32.mrb[0].mxu0
      %1082 = vmatprep.mubr.f32.mxu0 0.0
      %1083 = vmatmul.mubr.f32.gmra.mrb[0].mxu0 %v1007
      %v1084 = vpop.f32.mrb[0].mxu0
      %v1085 = vadd.f32 0.0, %v1084
      %v1086 = vpop.f32.mrb[0].mxu0
      %1087 = vdwg.mxu0
      %1090 = vrot.lane.b32.xlu0 %v457, 124
      %v1091 = vpop.permute.xlu0 %1090
      %1092 = vrot.lane.b32.xlu0 %v462, 124
      %v1093 = vpop.permute.xlu0 %1092
      %v1094 = vsel %vm267, %v457, 0
      %v1096 = vsel %vm267, %v462, 0
      %v1098 = vsel %vm267, %v1091, 0
      %v1100 = vsel %vm267, %v1093, 0
      %1102 = vmatprep.subr.mxu0 0.0
      %1103 = vmatpush1.xpose.msra.mxu0 %v1098
      %1104 = vmatprep.subr.mxu0 0.0
      %1105 = vmatpush1.xpose.msra.mxu0 %v1100
      %1106 = vmatprep.subr.mxu0 0.0
      %1107 = vmatpush1.xpose.msra.mxu0 0.0
      %1108 = vmatprep.subr.mxu0 0.0
      %1109 = vmatpush1.xpose.msra.mxu0 0.0
      %1110 = vmatprep.subr.mxu0 0.0
      %1111 = vmatpush1.xpose.msra.mxu0 0.0
      %1112 = vmatprep.subr.mxu0 0.0
      %1113 = vmatpush1.xpose.msra.mxu0 0.0
      %1114 = vmatprep.subr.mxu0 0.0
      %1115 = vmatpush1.xpose.msra.mxu0 0.0
      %1116 = vmatprep.subr.mxu0 0.0
      %1117 = vmatpush1.xpose.msra.mxu0 0.0
      %1118 = vmatprep.subr.mxu0 0.0
      %1119 = vmatpush1.xpose.msra.mxu0 0.0
      %1120 = vmatprep.subr.mxu0 0.0
      %1121 = vmatpush1.xpose.msra.mxu0 0.0
      %1122 = vmatprep.subr.mxu0 0.0
      %1123 = vmatpush1.xpose.msra.mxu0 0.0
      %1124 = vmatprep.subr.mxu0 0.0
      %1125 = vmatpush1.xpose.msra.mxu0 0.0
      %1126 = vmatprep.subr.mxu0 0.0
      %1127 = vmatpush1.xpose.msra.mxu0 0.0
      %1128 = vmatprep.subr.mxu0 0.0
      %1129 = vmatpush1.xpose.msra.mxu0 0.0
      %1130 = vmatprep.subr.mxu0 0.0
      %1131 = vmatpush1.xpose.msra.mxu0 0.0
      %1132 = vmatprep.subr.mxu0 0.0
      %1133 = vmatpush1.xpose.msra.mxu0 0.0
      %1134 = vmatprep.subr.mxu0 0.0
      %1135 = vmatpush1.xpose.msra.mxu0 0.0
      %1136 = vmatprep.subr.mxu0 0.0
      %1137 = vmatpush1.xpose.msra.mxu0 0.0
      %1138 = vmatprep.subr.mxu0 0.0
      %1139 = vmatpush1.xpose.msra.mxu0 0.0
      %1140 = vmatprep.subr.mxu0 0.0
      %1141 = vmatpush1.xpose.msra.mxu0 0.0
      %1142 = vmatprep.subr.mxu0 0.0
      %1143 = vmatpush1.xpose.msra.mxu0 0.0
      %1144 = vmatprep.subr.mxu0 0.0
      %1145 = vmatpush1.xpose.msra.mxu0 0.0
      %1146 = vmatprep.subr.mxu0 0.0
      %1147 = vmatpush1.xpose.msra.mxu0 0.0
      %1148 = vmatprep.subr.mxu0 0.0
      %1149 = vmatpush1.xpose.msra.mxu0 0.0
      %1150 = vmatprep.subr.mxu0 0.0
      %1151 = vmatpush1.xpose.msra.mxu0 0.0
      %1152 = vmatprep.subr.mxu0 0.0
      %1153 = vmatpush1.xpose.msra.mxu0 0.0
      %1154 = vmatprep.subr.mxu0 0.0
      %1155 = vmatpush1.xpose.msra.mxu0 0.0
      %1156 = vmatprep.subr.mxu0 0.0
      %1157 = vmatpush1.xpose.msra.mxu0 0.0
      %1158 = vmatprep.subr.mxu0 0.0
      %1159 = vmatpush1.xpose.msra.mxu0 0.0
      %1160 = vmatprep.subr.mxu0 0.0
      %1161 = vmatpush1.xpose.msra.mxu0 0.0
      %1162 = vmatprep.subr.mxu0 0.0
      %1163 = vmatpush1.xpose.msra.mxu0 0.0
      %1164 = vmatprep.subr.mxu0 0.0
      %1165 = vmatpush1.xpose.msra.mxu0 0.0
      %1166 = vmatprep.mubr.f32.mxu0 0.0
      %1167 = vmatmul.mubr.f32.gmra.mrb[0].mxu0 %v1094
      %v1168 = vpop.f32.mrb[0].mxu0
      %v1169 = vadd.f32 0.0, %v1168
      %v1170 = vpop.f32.mrb[0].mxu0
      %1171 = vmatprep.mubr.f32.mxu0 0.0
      %1172 = vmatmul.mubr.f32.gmra.mrb[0].mxu0 %v1096
      %v1173 = vpop.f32.mrb[0].mxu0
      %v1174 = vadd.f32 0.0, %v1173
      %v1175 = vpop.f32.mrb[0].mxu0
      %1176 = vdwg.mxu0
      %vm1177 = vcmask 130048
      %v1178 = vsel %vm1177, %v546, -inf
      %1179 = vmax.xlane.f32.xlu0 %v1178
      %v1180 = vpop.xlane.xlu0 %1179
      %v1181 = vsel %vm1177, %v551, -inf
      %1182 = vmax.xlane.f32.xlu0 %v1181
      %v1183 = vpop.xlane.xlu0 %1182
      %v1184 = vsel %vm1177, %v635, -inf
      %1185 = vmax.xlane.f32.xlu0 %v1184
      %v1186 = vpop.xlane.xlu0 %1185
      %v1187 = vsel %vm1177, %v640, -inf
      %1188 = vmax.xlane.f32.xlu0 %v1187
      %v1189 = vpop.xlane.xlu0 %1188
      %v1190 = vsel %vm1177, %v724, -inf
      %1191 = vmax.xlane.f32.xlu0 %v1190
      %v1192 = vpop.xlane.xlu0 %1191
      %v1193 = vsel %vm1177, %v729, -inf
      %1194 = vmax.xlane.f32.xlu0 %v1193
      %v1195 = vpop.xlane.xlu0 %1194
      %v1196 = vsel %vm1177, %v813, -inf
      %1197 = vmax.xlane.f32.xlu0 %v1196
      %v1198 = vpop.xlane.xlu0 %1197
      %v1199 = vsel %vm1177, %v818, -inf
      %1200 = vmax.xlane.f32.xlu0 %v1199
      %v1201 = vpop.xlane.xlu0 %1200
      %v1202 = vsel %vm1177, %v902, -inf
      %1203 = vmax.xlane.f32.xlu0 %v1202
      %v1204 = vpop.xlane.xlu0 %1203
      %v1205 = vsel %vm1177, %v907, -inf
      %1206 = vmax.xlane.f32.xlu0 %v1205
      %v1207 = vpop.xlane.xlu0 %1206
      %v1208 = vsel %vm1177, %v991, -inf
      %1209 = vmax.xlane.f32.xlu0 %v1208
      %v1210 = vpop.xlane.xlu0 %1209
      %v1211 = vsel %vm1177, %v996, -inf
      %1212 = vmax.xlane.f32.xlu0 %v1211
      %v1213 = vpop.xlane.xlu0 %1212
      %v1214 = vsel %vm1177, %v1080, -inf
      %1215 = vmax.xlane.f32.xlu0 %v1214
      %v1216 = vpop.xlane.xlu0 %1215
      %v1217 = vsel %vm1177, %v1085, -inf
      %1218 = vmax.xlane.f32.xlu0 %v1217
      %v1219 = vpop.xlane.xlu0 %1218
      %v1220 = vsel %vm1177, %v1169, -inf
      %1221 = vmax.xlane.f32.xlu0 %v1220
      %v1222 = vpop.xlane.xlu0 %1221
      %v1223 = vsel %vm1177, %v1174, -inf
      %1224 = vmax.xlane.f32.xlu0 %v1223
      %v1225 = vpop.xlane.xlu0 %1224
      %v1226 = vsub.f32 %v546, %v1180
      %v1227 = vsub.f32 %v551, %v1183
      %v1228 = vsub.f32 %v635, %v1186
      %v1229 = vsub.f32 %v640, %v1189
      %v1230 = vsub.f32 %v724, %v1192
      %v1231 = vsub.f32 %v729, %v1195
      %v1232 = vsub.f32 %v813, %v1198
      %v1233 = vsub.f32 %v818, %v1201
      %v1234 = vsub.f32 %v902, %v1204
      %v1235 = vsub.f32 %v907, %v1207
      %v1236 = vsub.f32 %v991, %v1210
      %v1237 = vsub.f32 %v996, %v1213
      %v1238 = vsub.f32 %v1080, %v1216
      %v1239 = vsub.f32 %v1085, %v1219
      %v1240 = vsub.f32 %v1169, %v1222
      %v1241 = vsub.f32 %v1174, %v1225
      %v1242 = vmul.f32 %v1226, 1.442695
      %v1243 = vpow.pop %v1242
      %v1244 = vmul.f32 %v1227, 1.442695
      %v1245 = vpow.pop %v1244
      %v1246 = vmul.f32 %v1228, 1.442695
      %v1247 = vpow.pop %v1246
      %v1248 = vmul.f32 %v1229, 1.442695
      %v1249 = vpow.pop %v1248
      %v1250 = vmul.f32 %v1230, 1.442695
      %v1251 = vpow.pop %v1250
      %v1252 = vmul.f32 %v1231, 1.442695
      %v1253 = vpow.pop %v1252
      %v1254 = vmul.f32 %v1232, 1.442695
      %v1255 = vpow.pop %v1254
      %v1256 = vmul.f32 %v1233, 1.442695
      %v1257 = vpow.pop %v1256
      %v1258 = vmul.f32 %v1234, 1.442695
      %v1259 = vpow.pop %v1258
      %v1260 = vmul.f32 %v1235, 1.442695
      %v1261 = vpow.pop %v1260
      %v1262 = vmul.f32 %v1236, 1.442695
      %v1263 = vpow.pop %v1262
      %v1264 = vmul.f32 %v1237, 1.442695
      %v1265 = vpow.pop %v1264
      %v1266 = vmul.f32 %v1238, 1.442695
      %v1267 = vpow.pop %v1266
      %v1268 = vmul.f32 %v1239, 1.442695
      %v1269 = vpow.pop %v1268
      %v1270 = vmul.f32 %v1240, 1.442695
      %v1271 = vpow.pop %v1270
      %v1272 = vmul.f32 %v1241, 1.442695
      %v1273 = vpow.pop %v1272
      %v1274 = vsel %vm1177, %v1243, 0.0
      %1275 = vadd.xlane.f32.xlu0 %v1274
      %v1276 = vpop.xlane.xlu0 %1275
      %v1277 = vsel %vm1177, %v1245, 0.0
      %1278 = vadd.xlane.f32.xlu0 %v1277
      %v1279 = vpop.xlane.xlu0 %1278
      %v1280 = vsel %vm1177, %v1247, 0.0
      %1281 = vadd.xlane.f32.xlu0 %v1280
      %v1282 = vpop.xlane.xlu0 %1281
      %v1283 = vsel %vm1177, %v1249, 0.0
      %1284 = vadd.xlane.f32.xlu0 %v1283
      %v1285 = vpop.xlane.xlu0 %1284
      %v1286 = vsel %vm1177, %v1251, 0.0
      %1287 = vadd.xlane.f32.xlu0 %v1286
      %v1288 = vpop.xlane.xlu0 %1287
      %v1289 = vsel %vm1177, %v1253, 0.0
      %1290 = vadd.xlane.f32.xlu0 %v1289
      %v1291 = vpop.xlane.xlu0 %1290
      %v1292 = vsel %vm1177, %v1255, 0.0
      %1293 = vadd.xlane.f32.xlu0 %v1292
      %v1294 = vpop.xlane.xlu0 %1293
      %v1295 = vsel %vm1177, %v1257, 0.0
      %1296 = vadd.xlane.f32.xlu0 %v1295
      %v1297 = vpop.xlane.xlu0 %1296
      %v1298 = vsel %vm1177, %v1259, 0.0
      %1299 = vadd.xlane.f32.xlu0 %v1298
      %v1300 = vpop.xlane.xlu0 %1299
      %v1301 = vsel %vm1177, %v1261, 0.0
      %1302 = vadd.xlane.f32.xlu0 %v1301
      %v1303 = vpop.xlane.xlu0 %1302
      %v1304 = vsel %vm1177, %v1263, 0.0
      %1305 = vadd.xlane.f32.xlu0 %v1304
      %v1306 = vpop.xlane.xlu0 %1305
      %v1307 = vsel %vm1177, %v1265, 0.0
      %1308 = vadd.xlane.f32.xlu0 %v1307
      %v1309 = vpop.xlane.xlu0 %1308
      %v1310 = vsel %vm1177, %v1267, 0.0
      %1311 = vadd.xlane.f32.xlu0 %v1310
      %v1312 = vpop.xlane.xlu0 %1311
      %v1313 = vsel %vm1177, %v1269, 0.0
      %1314 = vadd.xlane.f32.xlu0 %v1313
      %v1315 = vpop.xlane.xlu0 %1314
      %v1316 = vsel %vm1177, %v1271, 0.0
      %1317 = vadd.xlane.f32.xlu0 %v1316
      %v1318 = vpop.xlane.xlu0 %1317
      %v1319 = vsel %vm1177, %v1273, 0.0
      %1320 = vadd.xlane.f32.xlu0 %v1319
      %v1321 = vpop.xlane.xlu0 %1320
      %1322 = vrot.lane.b32.xlu0 %v387, 120
      %v1323 = vpop.permute.xlu0 %1322
      %1324 = vrot.lane.b32.xlu0 %v392, 120
      %v1325 = vpop.permute.xlu0 %1324
      %v1329 = vsel %vm1177, %v1243, 0
      %v1332 = vsel %vm1177, %v1245, 0
      %1334 = vmatprep.subr.mxu0 0.0
      %1335 = vmatpush1.msra.mxu0 %v1323
      %1336 = vmatprep.subr.mxu0 0.0
      %1337 = vmatpush1.msra.mxu0 %v1325
      %1338 = vmatprep.subr.mxu0 0.0
      %1339 = vmatpush1.msra.mxu0 0.0
      %1340 = vmatprep.subr.mxu0 0.0
      %1341 = vmatpush1.msra.mxu0 0.0
      %1342 = vmatprep.subr.mxu0 0.0
      %1343 = vmatpush1.msra.mxu0 0.0
      %1344 = vmatprep.subr.mxu0 0.0
      %1345 = vmatpush1.msra.mxu0 0.0
      %1346 = vmatprep.subr.mxu0 0.0
      %1347 = vmatpush1.msra.mxu0 0.0
      %1348 = vmatprep.subr.mxu0 0.0
      %1349 = vmatpush1.msra.mxu0 0.0
      %1350 = vmatprep.subr.mxu0 0.0
      %1351 = vmatpush1.msra.mxu0 0.0
      %1352 = vmatprep.subr.mxu0 0.0
      %1353 = vmatpush1.msra.mxu0 0.0
      %1354 = vmatprep.subr.mxu0 0.0
      %1355 = vmatpush1.msra.mxu0 0.0
      %1356 = vmatprep.subr.mxu0 0.0
      %1357 = vmatpush1.msra.mxu0 0.0
      %1358 = vmatprep.subr.mxu0 0.0
      %1359 = vmatpush1.msra.mxu0 0.0
      %1360 = vmatprep.subr.mxu0 0.0
      %1361 = vmatpush1.msra.mxu0 0.0
      %1362 = vmatprep.subr.mxu0 0.0
      %1363 = vmatpush1.msra.mxu0 0.0
      %1364 = vmatprep.subr.mxu0 0.0
      %1365 = vmatpush1.msra.mxu0 0.0
      %1366 = vmatprep.subr.mxu0 0.0
      %1367 = vmatpush1.msra.mxu0 0.0
      %1368 = vmatprep.subr.mxu0 0.0
      %1369 = vmatpush1.msra.mxu0 0.0
      %1370 = vmatprep.subr.mxu0 0.0
      %1371 = vmatpush1.msra.mxu0 0.0
      %1372 = vmatprep.subr.mxu0 0.0
      %1373 = vmatpush1.msra.mxu0 0.0
      %1374 = vmatprep.subr.mxu0 0.0
      %1375 = vmatpush1.msra.mxu0 0.0
      %1376 = vmatprep.subr.mxu0 0.0
      %1377 = vmatpush1.msra.mxu0 0.0
      %1378 = vmatprep.subr.mxu0 0.0
      %1379 = vmatpush1.msra.mxu0 0.0
      %1380 = vmatprep.subr.mxu0 0.0
      %1381 = vmatpush1.msra.mxu0 0.0
      %1382 = vmatprep.subr.mxu0 0.0
      %1383 = vmatpush1.msra.mxu0 0.0
      %1384 = vmatprep.subr.mxu0 0.0
      %1385 = vmatpush1.msra.mxu0 0.0
      %1386 = vmatprep.subr.mxu0 0.0
      %1387 = vmatpush1.msra.mxu0 0.0
      %1388 = vmatprep.subr.mxu0 0.0
      %1389 = vmatpush1.msra.mxu0 0.0
      %1390 = vmatprep.subr.mxu0 0.0
      %1391 = vmatpush1.msra.mxu0 0.0
      %1392 = vmatprep.subr.mxu0 0.0
      %1393 = vmatpush1.msra.mxu0 0.0
      %1394 = vmatprep.subr.mxu0 0.0
      %1395 = vmatpush1.msra.mxu0 0.0
      %1396 = vmatprep.subr.mxu0 0.0
      %1397 = vmatpush1.msra.mxu0 0.0
      %1398 = vmatprep.mubr.f32.mxu0 0.0
      %1399 = vmatmul.mubr.f32.gmra.mrb[0].mxu0 %v1329
      %v1400 = vpop.f32.mrb[0].mxu0
      %v1401 = vadd.f32 0.0, %v1400
      %v1402 = vpop.f32.mrb[0].mxu0
      %1403 = vmatprep.mubr.f32.mxu0 0.0
      %1404 = vmatmul.mubr.f32.gmra.mrb[0].mxu0 %v1332
      %v1405 = vpop.f32.mrb[0].mxu0
      %v1406 = vadd.f32 0.0, %v1405
      %v1407 = vpop.f32.mrb[0].mxu0
      %1408 = vdwg.mxu0
      %1409 = vrot.lane.b32.xlu0 %v397, 120
      %v1410 = vpop.permute.xlu0 %1409
      %1411 = vrot.lane.b32.xlu0 %v402, 120
      %v1412 = vpop.permute.xlu0 %1411
      %v1416 = vsel %vm1177, %v1247, 0
      %v1419 = vsel %vm1177, %v1249, 0
      %1421 = vmatprep.subr.mxu0 0.0
      %1422 = vmatpush1.msra.mxu0 %v1410
      %1423 = vmatprep.subr.mxu0 0.0
      %1424 = vmatpush1.msra.mxu0 %v1412
      %1425 = vmatprep.subr.mxu0 0.0
      %1426 = vmatpush1.msra.mxu0 0.0
      %1427 = vmatprep.subr.mxu0 0.0
      %1428 = vmatpush1.msra.mxu0 0.0
      %1429 = vmatprep.subr.mxu0 0.0
      %1430 = vmatpush1.msra.mxu0 0.0
      %1431 = vmatprep.subr.mxu0 0.0
      %1432 = vmatpush1.msra.mxu0 0.0
      %1433 = vmatprep.subr.mxu0 0.0
      %1434 = vmatpush1.msra.mxu0 0.0
      %1435 = vmatprep.subr.mxu0 0.0
      %1436 = vmatpush1.msra.mxu0 0.0
      %1437 = vmatprep.subr.mxu0 0.0
      %1438 = vmatpush1.msra.mxu0 0.0
      %1439 = vmatprep.subr.mxu0 0.0
      %1440 = vmatpush1.msra.mxu0 0.0
      %1441 = vmatprep.subr.mxu0 0.0
      %1442 = vmatpush1.msra.mxu0 0.0
      %1443 = vmatprep.subr.mxu0 0.0
      %1444 = vmatpush1.msra.mxu0 0.0
      %1445 = vmatprep.subr.mxu0 0.0
      %1446 = vmatpush1.msra.mxu0 0.0
      %1447 = vmatprep.subr.mxu0 0.0
      %1448 = vmatpush1.msra.mxu0 0.0
      %1449 = vmatprep.subr.mxu0 0.0
      %1450 = vmatpush1.msra.mxu0 0.0
      %1451 = vmatprep.subr.mxu0 0.0
      %1452 = vmatpush1.msra.mxu0 0.0
      %1453 = vmatprep.subr.mxu0 0.0
      %1454 = vmatpush1.msra.mxu0 0.0
      %1455 = vmatprep.subr.mxu0 0.0
      %1456 = vmatpush1.msra.mxu0 0.0
      %1457 = vmatprep.subr.mxu0 0.0
      %1458 = vmatpush1.msra.mxu0 0.0
      %1459 = vmatprep.subr.mxu0 0.0
      %1460 = vmatpush1.msra.mxu0 0.0
      %1461 = vmatprep.subr.mxu0 0.0
      %1462 = vmatpush1.msra.mxu0 0.0
      %1463 = vmatprep.subr.mxu0 0.0
      %1464 = vmatpush1.msra.mxu0 0.0
      %1465 = vmatprep.subr.mxu0 0.0
      %1466 = vmatpush1.msra.mxu0 0.0
      %1467 = vmatprep.subr.mxu0 0.0
      %1468 = vmatpush1.msra.mxu0 0.0
      %1469 = vmatprep.subr.mxu0 0.0
      %1470 = vmatpush1.msra.mxu0 0.0
      %1471 = vmatprep.subr.mxu0 0.0
      %1472 = vmatpush1.msra.mxu0 0.0
      %1473 = vmatprep.subr.mxu0 0.0
      %1474 = vmatpush1.msra.mxu0 0.0
      %1475 = vmatprep.subr.mxu0 0.0
      %1476 = vmatpush1.msra.mxu0 0.0
      %1477 = vmatprep.subr.mxu0 0.0
      %1478 = vmatpush1.msra.mxu0 0.0
      %1479 = vmatprep.subr.mxu0 0.0
      %1480 = vmatpush1.msra.mxu0 0.0
      %1481 = vmatprep.subr.mxu0 0.0
      %1482 = vmatpush1.msra.mxu0 0.0
      %1483 = vmatprep.subr.mxu0 0.0
      %1484 = vmatpush1.msra.mxu0 0.0
      %1485 = vmatprep.mubr.f32.mxu0 0.0
      %1486 = vmatmul.mubr.f32.gmra.mrb[0].mxu0 %v1416
      %v1487 = vpop.f32.mrb[0].mxu0
      %v1488 = vadd.f32 0.0, %v1487
      %v1489 = vpop.f32.mrb[0].mxu0
      %1490 = vmatprep.mubr.f32.mxu0 0.0
      %1491 = vmatmul.mubr.f32.gmra.mrb[0].mxu0 %v1419
      %v1492 = vpop.f32.mrb[0].mxu0
      %v1493 = vadd.f32 0.0, %v1492
      %v1494 = vpop.f32.mrb[0].mxu0
      %1495 = vdwg.mxu0
      %1496 = vrot.lane.b32.xlu0 %v407, 120
      %v1497 = vpop.permute.xlu0 %1496
      %1498 = vrot.lane.b32.xlu0 %v412, 120
      %v1499 = vpop.permute.xlu0 %1498
      %v1503 = vsel %vm1177, %v1251, 0
      %v1506 = vsel %vm1177, %v1253, 0
      %1508 = vmatprep.subr.mxu0 0.0
      %1509 = vmatpush1.msra.mxu0 %v1497
      %1510 = vmatprep.subr.mxu0 0.0
      %1511 = vmatpush1.msra.mxu0 %v1499
      %1512 = vmatprep.subr.mxu0 0.0
      %1513 = vmatpush1.msra.mxu0 0.0
      %1514 = vmatprep.subr.mxu0 0.0
      %1515 = vmatpush1.msra.mxu0 0.0
      %1516 = vmatprep.subr.mxu0 0.0
      %1517 = vmatpush1.msra.mxu0 0.0
      %1518 = vmatprep.subr.mxu0 0.0
      %1519 = vmatpush1.msra.mxu0 0.0
      %1520 = vmatprep.subr.mxu0 0.0
      %1521 = vmatpush1.msra.mxu0 0.0
      %1522 = vmatprep.subr.mxu0 0.0
      %1523 = vmatpush1.msra.mxu0 0.0
      %1524 = vmatprep.subr.mxu0 0.0
      %1525 = vmatpush1.msra.mxu0 0.0
      %1526 = vmatprep.subr.mxu0 0.0
      %1527 = vmatpush1.msra.mxu0 0.0
      %1528 = vmatprep.subr.mxu0 0.0
      %1529 = vmatpush1.msra.mxu0 0.0
      %1530 = vmatprep.subr.mxu0 0.0
      %1531 = vmatpush1.msra.mxu0 0.0
      %1532 = vmatprep.subr.mxu0 0.0
      %1533 = vmatpush1.msra.mxu0 0.0
      %1534 = vmatprep.subr.mxu0 0.0
      %1535 = vmatpush1.msra.mxu0 0.0
      %1536 = vmatprep.subr.mxu0 0.0
      %1537 = vmatpush1.msra.mxu0 0.0
      %1538 = vmatprep.subr.mxu0 0.0
      %1539 = vmatpush1.msra.mxu0 0.0
      %1540 = vmatprep.subr.mxu0 0.0
      %1541 = vmatpush1.msra.mxu0 0.0
      %1542 = vmatprep.subr.mxu0 0.0
      %1543 = vmatpush1.msra.mxu0 0.0
      %1544 = vmatprep.subr.mxu0 0.0
      %1545 = vmatpush1.msra.mxu0 0.0
      %1546 = vmatprep.subr.mxu0 0.0
      %1547 = vmatpush1.msra.mxu0 0.0
      %1548 = vmatprep.subr.mxu0 0.0
      %1549 = vmatpush1.msra.mxu0 0.0
      %1550 = vmatprep.subr.mxu0 0.0
      %1551 = vmatpush1.msra.mxu0 0.0
      %1552 = vmatprep.subr.mxu0 0.0
      %1553 = vmatpush1.msra.mxu0 0.0
      %1554 = vmatprep.subr.mxu0 0.0
      %1555 = vmatpush1.msra.mxu0 0.0
      %1556 = vmatprep.subr.mxu0 0.0
      %1557 = vmatpush1.msra.mxu0 0.0
      %1558 = vmatprep.subr.mxu0 0.0
      %1559 = vmatpush1.msra.mxu0 0.0
      %1560 = vmatprep.subr.mxu0 0.0
      %1561 = vmatpush1.msra.mxu0 0.0
      %1562 = vmatprep.subr.mxu0 0.0
      %1563 = vmatpush1.msra.mxu0 0.0
      %1564 = vmatprep.subr.mxu0 0.0
      %1565 = vmatpush1.msra.mxu0 0.0
      %1566 = vmatprep.subr.mxu0 0.0
      %1567 = vmatpush1.msra.mxu0 0.0
      %1568 = vmatprep.subr.mxu0 0.0
      %1569 = vmatpush1.msra.mxu0 0.0
      %1570 = vmatprep.subr.mxu0 0.0
      %1571 = vmatpush1.msra.mxu0 0.0
      %1572 = vmatprep.mubr.f32.mxu0 0.0
      %1573 = vmatmul.mubr.f32.gmra.mrb[0].mxu0 %v1503
      %v1574 = vpop.f32.mrb[0].mxu0
      %v1575 = vadd.f32 0.0, %v1574
      %v1576 = vpop.f32.mrb[0].mxu0
      %1577 = vmatprep.mubr.f32.mxu0 0.0
      %1578 = vmatmul.mubr.f32.gmra.mrb[0].mxu0 %v1506
      %v1579 = vpop.f32.mrb[0].mxu0
      %v1580 = vadd.f32 0.0, %v1579
      %v1581 = vpop.f32.mrb[0].mxu0
      %1582 = vdwg.mxu0
      %1583 = vrot.lane.b32.xlu0 %v417, 120
      %v1584 = vpop.permute.xlu0 %1583
      %1585 = vrot.lane.b32.xlu0 %v422, 120
      %v1586 = vpop.permute.xlu0 %1585
      %v1590 = vsel %vm1177, %v1255, 0
      %v1593 = vsel %vm1177, %v1257, 0
      %1595 = vmatprep.subr.mxu0 0.0
      %1596 = vmatpush1.msra.mxu0 %v1584
      %1597 = vmatprep.subr.mxu0 0.0
      %1598 = vmatpush1.msra.mxu0 %v1586
      %1599 = vmatprep.subr.mxu0 0.0
      %1600 = vmatpush1.msra.mxu0 0.0
      %1601 = vmatprep.subr.mxu0 0.0
      %1602 = vmatpush1.msra.mxu0 0.0
      %1603 = vmatprep.subr.mxu0 0.0
      %1604 = vmatpush1.msra.mxu0 0.0
      %1605 = vmatprep.subr.mxu0 0.0
      %1606 = vmatpush1.msra.mxu0 0.0
      %1607 = vmatprep.subr.mxu0 0.0
      %1608 = vmatpush1.msra.mxu0 0.0
      %1609 = vmatprep.subr.mxu0 0.0
      %1610 = vmatpush1.msra.mxu0 0.0
      %1611 = vmatprep.subr.mxu0 0.0
      %1612 = vmatpush1.msra.mxu0 0.0
      %1613 = vmatprep.subr.mxu0 0.0
      %1614 = vmatpush1.msra.mxu0 0.0
      %1615 = vmatprep.subr.mxu0 0.0
      %1616 = vmatpush1.msra.mxu0 0.0
      %1617 = vmatprep.subr.mxu0 0.0
      %1618 = vmatpush1.msra.mxu0 0.0
      %1619 = vmatprep.subr.mxu0 0.0
      %1620 = vmatpush1.msra.mxu0 0.0
      %1621 = vmatprep.subr.mxu0 0.0
      %1622 = vmatpush1.msra.mxu0 0.0
      %1623 = vmatprep.subr.mxu0 0.0
      %1624 = vmatpush1.msra.mxu0 0.0
      %1625 = vmatprep.subr.mxu0 0.0
      %1626 = vmatpush1.msra.mxu0 0.0
      %1627 = vmatprep.subr.mxu0 0.0
      %1628 = vmatpush1.msra.mxu0 0.0
      %1629 = vmatprep.subr.mxu0 0.0
      %1630 = vmatpush1.msra.mxu0 0.0
      %1631 = vmatprep.subr.mxu0 0.0
      %1632 = vmatpush1.msra.mxu0 0.0
      %1633 = vmatprep.subr.mxu0 0.0
      %1634 = vmatpush1.msra.mxu0 0.0
      %1635 = vmatprep.subr.mxu0 0.0
      %1636 = vmatpush1.msra.mxu0 0.0
      %1637 = vmatprep.subr.mxu0 0.0
      %1638 = vmatpush1.msra.mxu0 0.0
      %1639 = vmatprep.subr.mxu0 0.0
      %1640 = vmatpush1.msra.mxu0 0.0
      %1641 = vmatprep.subr.mxu0 0.0
      %1642 = vmatpush1.msra.mxu0 0.0
      %1643 = vmatprep.subr.mxu0 0.0
      %1644 = vmatpush1.msra.mxu0 0.0
      %1645 = vmatprep.subr.mxu0 0.0
      %1646 = vmatpush1.msra.mxu0 0.0
      %1647 = vmatprep.subr.mxu0 0.0
      %1648 = vmatpush1.msra.mxu0 0.0
      %1649 = vmatprep.subr.mxu0 0.0
      %1650 = vmatpush1.msra.mxu0 0.0
      %1651 = vmatprep.subr.mxu0 0.0
      %1652 = vmatpush1.msra.mxu0 0.0
      %1653 = vmatprep.subr.mxu0 0.0
      %1654 = vmatpush1.msra.mxu0 0.0
      %1655 = vmatprep.subr.mxu0 0.0
      %1656 = vmatpush1.msra.mxu0 0.0
      %1657 = vmatprep.subr.mxu0 0.0
      %1658 = vmatpush1.msra.mxu0 0.0
      %1659 = vmatprep.mubr.f32.mxu0 0.0
      %1660 = vmatmul.mubr.f32.gmra.mrb[0].mxu0 %v1590
      %v1661 = vpop.f32.mrb[0].mxu0
      %v1662 = vadd.f32 0.0, %v1661
      %v1663 = vpop.f32.mrb[0].mxu0
      %1664 = vmatprep.mubr.f32.mxu0 0.0
      %1665 = vmatmul.mubr.f32.gmra.mrb[0].mxu0 %v1593
      %v1666 = vpop.f32.mrb[0].mxu0
      %v1667 = vadd.f32 0.0, %v1666
      %v1668 = vpop.f32.mrb[0].mxu0
      %1669 = vdwg.mxu0
      %1670 = vrot.lane.b32.xlu0 %v427, 120
      %v1671 = vpop.permute.xlu0 %1670
      %1672 = vrot.lane.b32.xlu0 %v432, 120
      %v1673 = vpop.permute.xlu0 %1672
      %v1677 = vsel %vm1177, %v1259, 0
      %v1680 = vsel %vm1177, %v1261, 0
      %1682 = vmatprep.subr.mxu0 0.0
      %1683 = vmatpush1.msra.mxu0 %v1671
      %1684 = vmatprep.subr.mxu0 0.0
      %1685 = vmatpush1.msra.mxu0 %v1673
      %1686 = vmatprep.subr.mxu0 0.0
      %1687 = vmatpush1.msra.mxu0 0.0
      %1688 = vmatprep.subr.mxu0 0.0
      %1689 = vmatpush1.msra.mxu0 0.0
      %1690 = vmatprep.subr.mxu0 0.0
      %1691 = vmatpush1.msra.mxu0 0.0
      %1692 = vmatprep.subr.mxu0 0.0
      %1693 = vmatpush1.msra.mxu0 0.0
      %1694 = vmatprep.subr.mxu0 0.0
      %1695 = vmatpush1.msra.mxu0 0.0
      %1696 = vmatprep.subr.mxu0 0.0
      %1697 = vmatpush1.msra.mxu0 0.0
      %1698 = vmatprep.subr.mxu0 0.0
      %1699 = vmatpush1.msra.mxu0 0.0
      %1700 = vmatprep.subr.mxu0 0.0
      %1701 = vmatpush1.msra.mxu0 0.0
      %1702 = vmatprep.subr.mxu0 0.0
      %1703 = vmatpush1.msra.mxu0 0.0
      %1704 = vmatprep.subr.mxu0 0.0
      %1705 = vmatpush1.msra.mxu0 0.0
      %1706 = vmatprep.subr.mxu0 0.0
      %1707 = vmatpush1.msra.mxu0 0.0
      %1708 = vmatprep.subr.mxu0 0.0
      %1709 = vmatpush1.msra.mxu0 0.0
      %1710 = vmatprep.subr.mxu0 0.0
      %1711 = vmatpush1.msra.mxu0 0.0
      %1712 = vmatprep.subr.mxu0 0.0
      %1713 = vmatpush1.msra.mxu0 0.0
      %1714 = vmatprep.subr.mxu0 0.0
      %1715 = vmatpush1.msra.mxu0 0.0
      %1716 = vmatprep.subr.mxu0 0.0
      %1717 = vmatpush1.msra.mxu0 0.0
      %1718 = vmatprep.subr.mxu0 0.0
      %1719 = vmatpush1.msra.mxu0 0.0
      %1720 = vmatprep.subr.mxu0 0.0
      %1721 = vmatpush1.msra.mxu0 0.0
      %1722 = vmatprep.subr.mxu0 0.0
      %1723 = vmatpush1.msra.mxu0 0.0
      %1724 = vmatprep.subr.mxu0 0.0
      %1725 = vmatpush1.msra.mxu0 0.0
      %1726 = vmatprep.subr.mxu0 0.0
      %1727 = vmatpush1.msra.mxu0 0.0
      %1728 = vmatprep.subr.mxu0 0.0
      %1729 = vmatpush1.msra.mxu0 0.0
      %1730 = vmatprep.subr.mxu0 0.0
      %1731 = vmatpush1.msra.mxu0 0.0
      %1732 = vmatprep.subr.mxu0 0.0
      %1733 = vmatpush1.msra.mxu0 0.0
      %1734 = vmatprep.subr.mxu0 0.0
      %1735 = vmatpush1.msra.mxu0 0.0
      %1736 = vmatprep.subr.mxu0 0.0
      %1737 = vmatpush1.msra.mxu0 0.0
      %1738 = vmatprep.subr.mxu0 0.0
      %1739 = vmatpush1.msra.mxu0 0.0
      %1740 = vmatprep.subr.mxu0 0.0
      %1741 = vmatpush1.msra.mxu0 0.0
      %1742 = vmatprep.subr.mxu0 0.0
      %1743 = vmatpush1.msra.mxu0 0.0
      %1744 = vmatprep.subr.mxu0 0.0
      %1745 = vmatpush1.msra.mxu0 0.0
      %1746 = vmatprep.mubr.f32.mxu0 0.0
      %1747 = vmatmul.mubr.f32.gmra.mrb[0].mxu0 %v1677
      %v1748 = vpop.f32.mrb[0].mxu0
      %v1749 = vadd.f32 0.0, %v1748
      %v1750 = vpop.f32.mrb[0].mxu0
      %1751 = vmatprep.mubr.f32.mxu0 0.0
      %1752 = vmatmul.mubr.f32.gmra.mrb[0].mxu0 %v1680
      %v1753 = vpop.f32.mrb[0].mxu0
      %v1754 = vadd.f32 0.0, %v1753
      %v1755 = vpop.f32.mrb[0].mxu0
      %1756 = vdwg.mxu0
      %1757 = vrot.lane.b32.xlu0 %v437, 120
      %v1758 = vpop.permute.xlu0 %1757
      %1759 = vrot.lane.b32.xlu0 %v442, 120
      %v1760 = vpop.permute.xlu0 %1759
      %v1764 = vsel %vm1177, %v1263, 0
      %v1767 = vsel %vm1177, %v1265, 0
      %1769 = vmatprep.subr.mxu0 0.0
      %1770 = vmatpush1.msra.mxu0 %v1758
      %1771 = vmatprep.subr.mxu0 0.0
      %1772 = vmatpush1.msra.mxu0 %v1760
      %1773 = vmatprep.subr.mxu0 0.0
      %1774 = vmatpush1.msra.mxu0 0.0
      %1775 = vmatprep.subr.mxu0 0.0
      %1776 = vmatpush1.msra.mxu0 0.0
      %1777 = vmatprep.subr.mxu0 0.0
      %1778 = vmatpush1.msra.mxu0 0.0
      %1779 = vmatprep.subr.mxu0 0.0
      %1780 = vmatpush1.msra.mxu0 0.0
      %1781 = vmatprep.subr.mxu0 0.0
      %1782 = vmatpush1.msra.mxu0 0.0
      %1783 = vmatprep.subr.mxu0 0.0
      %1784 = vmatpush1.msra.mxu0 0.0
      %1785 = vmatprep.subr.mxu0 0.0
      %1786 = vmatpush1.msra.mxu0 0.0
      %1787 = vmatprep.subr.mxu0 0.0
      %1788 = vmatpush1.msra.mxu0 0.0
      %1789 = vmatprep.subr.mxu0 0.0
      %1790 = vmatpush1.msra.mxu0 0.0
      %1791 = vmatprep.subr.mxu0 0.0
      %1792 = vmatpush1.msra.mxu0 0.0
      %1793 = vmatprep.subr.mxu0 0.0
      %1794 = vmatpush1.msra.mxu0 0.0
      %1795 = vmatprep.subr.mxu0 0.0
      %1796 = vmatpush1.msra.mxu0 0.0
      %1797 = vmatprep.subr.mxu0 0.0
      %1798 = vmatpush1.msra.mxu0 0.0
      %1799 = vmatprep.subr.mxu0 0.0
      %1800 = vmatpush1.msra.mxu0 0.0
      %1801 = vmatprep.subr.mxu0 0.0
      %1802 = vmatpush1.msra.mxu0 0.0
      %1803 = vmatprep.subr.mxu0 0.0
      %1804 = vmatpush1.msra.mxu0 0.0
      %1805 = vmatprep.subr.mxu0 0.0
      %1806 = vmatpush1.msra.mxu0 0.0
      %1807 = vmatprep.subr.mxu0 0.0
      %1808 = vmatpush1.msra.mxu0 0.0
      %1809 = vmatprep.subr.mxu0 0.0
      %1810 = vmatpush1.msra.mxu0 0.0
      %1811 = vmatprep.subr.mxu0 0.0
      %1812 = vmatpush1.msra.mxu0 0.0
      %1813 = vmatprep.subr.mxu0 0.0
      %1814 = vmatpush1.msra.mxu0 0.0
      %1815 = vmatprep.subr.mxu0 0.0
      %1816 = vmatpush1.msra.mxu0 0.0
      %1817 = vmatprep.subr.mxu0 0.0
      %1818 = vmatpush1.msra.mxu0 0.0
      %1819 = vmatprep.subr.mxu0 0.0
      %1820 = vmatpush1.msra.mxu0 0.0
      %1821 = vmatprep.subr.mxu0 0.0
      %1822 = vmatpush1.msra.mxu0 0.0
      %1823 = vmatprep.subr.mxu0 0.0
      %1824 = vmatpush1.msra.mxu0 0.0
      %1825 = vmatprep.subr.mxu0 0.0
      %1826 = vmatpush1.msra.mxu0 0.0
      %1827 = vmatprep.subr.mxu0 0.0
      %1828 = vmatpush1.msra.mxu0 0.0
      %1829 = vmatprep.subr.mxu0 0.0
      %1830 = vmatpush1.msra.mxu0 0.0
      %1831 = vmatprep.subr.mxu0 0.0
      %1832 = vmatpush1.msra.mxu0 0.0
      %1833 = vmatprep.mubr.f32.mxu0 0.0
      %1834 = vmatmul.mubr.f32.gmra.mrb[0].mxu0 %v1764
      %v1835 = vpop.f32.mrb[0].mxu0
      %v1836 = vadd.f32 0.0, %v1835
      %v1837 = vpop.f32.mrb[0].mxu0
      %1838 = vmatprep.mubr.f32.mxu0 0.0
      %1839 = vmatmul.mubr.f32.gmra.mrb[0].mxu0 %v1767
      %v1840 = vpop.f32.mrb[0].mxu0
      %v1841 = vadd.f32 0.0, %v1840
      %v1842 = vpop.f32.mrb[0].mxu0
      %1843 = vdwg.mxu0
      %1844 = vrot.lane.b32.xlu0 %v447, 120
      %v1845 = vpop.permute.xlu0 %1844
      %1846 = vrot.lane.b32.xlu0 %v452, 120
      %v1847 = vpop.permute.xlu0 %1846
      %v1851 = vsel %vm1177, %v1267, 0
      %v1854 = vsel %vm1177, %v1269, 0
      %1856 = vmatprep.subr.mxu0 0.0
      %1857 = vmatpush1.msra.mxu0 %v1845
      %1858 = vmatprep.subr.mxu0 0.0
      %1859 = vmatpush1.msra.mxu0 %v1847
      %1860 = vmatprep.subr.mxu0 0.0
      %1861 = vmatpush1.msra.mxu0 0.0
      %1862 = vmatprep.subr.mxu0 0.0
      %1863 = vmatpush1.msra.mxu0 0.0
      %1864 = vmatprep.subr.mxu0 0.0
      %1865 = vmatpush1.msra.mxu0 0.0
      %1866 = vmatprep.subr.mxu0 0.0
      %1867 = vmatpush1.msra.mxu0 0.0
      %1868 = vmatprep.subr.mxu0 0.0
      %1869 = vmatpush1.msra.mxu0 0.0
      %1870 = vmatprep.subr.mxu0 0.0
      %1871 = vmatpush1.msra.mxu0 0.0
      %1872 = vmatprep.subr.mxu0 0.0
      %1873 = vmatpush1.msra.mxu0 0.0
      %1874 = vmatprep.subr.mxu0 0.0
      %1875 = vmatpush1.msra.mxu0 0.0
      %1876 = vmatprep.subr.mxu0 0.0
      %1877 = vmatpush1.msra.mxu0 0.0
      %1878 = vmatprep.subr.mxu0 0.0
      %1879 = vmatpush1.msra.mxu0 0.0
      %1880 = vmatprep.subr.mxu0 0.0
      %1881 = vmatpush1.msra.mxu0 0.0
      %1882 = vmatprep.subr.mxu0 0.0
      %1883 = vmatpush1.msra.mxu0 0.0
      %1884 = vmatprep.subr.mxu0 0.0
      %1885 = vmatpush1.msra.mxu0 0.0
      %1886 = vmatprep.subr.mxu0 0.0
      %1887 = vmatpush1.msra.mxu0 0.0
      %1888 = vmatprep.subr.mxu0 0.0
      %1889 = vmatpush1.msra.mxu0 0.0
      %1890 = vmatprep.subr.mxu0 0.0
      %1891 = vmatpush1.msra.mxu0 0.0
      %1892 = vmatprep.subr.mxu0 0.0
      %1893 = vmatpush1.msra.mxu0 0.0
      %1894 = vmatprep.subr.mxu0 0.0
      %1895 = vmatpush1.msra.mxu0 0.0
      %1896 = vmatprep.subr.mxu0 0.0
      %1897 = vmatpush1.msra.mxu0 0.0
      %1898 = vmatprep.subr.mxu0 0.0
      %1899 = vmatpush1.msra.mxu0 0.0
      %1900 = vmatprep.subr.mxu0 0.0
      %1901 = vmatpush1.msra.mxu0 0.0
      %1902 = vmatprep.subr.mxu0 0.0
      %1903 = vmatpush1.msra.mxu0 0.0
      %1904 = vmatprep.subr.mxu0 0.0
      %1905 = vmatpush1.msra.mxu0 0.0
      %1906 = vmatprep.subr.mxu0 0.0
      %1907 = vmatpush1.msra.mxu0 0.0
      %1908 = vmatprep.subr.mxu0 0.0
      %1909 = vmatpush1.msra.mxu0 0.0
      %1910 = vmatprep.subr.mxu0 0.0
      %1911 = vmatpush1.msra.mxu0 0.0
      %1912 = vmatprep.subr.mxu0 0.0
      %1913 = vmatpush1.msra.mxu0 0.0
      %1914 = vmatprep.subr.mxu0 0.0
      %1915 = vmatpush1.msra.mxu0 0.0
      %1916 = vmatprep.subr.mxu0 0.0
      %1917 = vmatpush1.msra.mxu0 0.0
      %1918 = vmatprep.subr.mxu0 0.0
      %1919 = vmatpush1.msra.mxu0 0.0
      %1920 = vmatprep.mubr.f32.mxu0 0.0
      %1921 = vmatmul.mubr.f32.gmra.mrb[0].mxu0 %v1851
      %v1922 = vpop.f32.mrb[0].mxu0
      %v1923 = vadd.f32 0.0, %v1922
      %v1924 = vpop.f32.mrb[0].mxu0
      %1925 = vmatprep.mubr.f32.mxu0 0.0
      %1926 = vmatmul.mubr.f32.gmra.mrb[0].mxu0 %v1854
      %v1927 = vpop.f32.mrb[0].mxu0
      %v1928 = vadd.f32 0.0, %v1927
      %v1929 = vpop.f32.mrb[0].mxu0
      %1930 = vdwg.mxu0
      %1931 = vrot.lane.b32.xlu0 %v457, 120
      %v1932 = vpop.permute.xlu0 %1931
      %1933 = vrot.lane.b32.xlu0 %v462, 120
      %v1934 = vpop.permute.xlu0 %1933
      %v1938 = vsel %vm1177, %v1271, 0
      %v1941 = vsel %vm1177, %v1273, 0
      %1943 = vmatprep.subr.mxu0 0.0
      %1944 = vmatpush1.msra.mxu0 %v1932
      %1945 = vmatprep.subr.mxu0 0.0
      %1946 = vmatpush1.msra.mxu0 %v1934
      %1947 = vmatprep.subr.mxu0 0.0
      %1948 = vmatpush1.msra.mxu0 0.0
      %1949 = vmatprep.subr.mxu0 0.0
      %1950 = vmatpush1.msra.mxu0 0.0
      %1951 = vmatprep.subr.mxu0 0.0
      %1952 = vmatpush1.msra.mxu0 0.0
      %1953 = vmatprep.subr.mxu0 0.0
      %1954 = vmatpush1.msra.mxu0 0.0
      %1955 = vmatprep.subr.mxu0 0.0
      %1956 = vmatpush1.msra.mxu0 0.0
      %1957 = vmatprep.subr.mxu0 0.0
      %1958 = vmatpush1.msra.mxu0 0.0
      %1959 = vmatprep.subr.mxu0 0.0
      %1960 = vmatpush1.msra.mxu0 0.0
      %1961 = vmatprep.subr.mxu0 0.0
      %1962 = vmatpush1.msra.mxu0 0.0
      %1963 = vmatprep.subr.mxu0 0.0
      %1964 = vmatpush1.msra.mxu0 0.0
      %1965 = vmatprep.subr.mxu0 0.0
      %1966 = vmatpush1.msra.mxu0 0.0
      %1967 = vmatprep.subr.mxu0 0.0
      %1968 = vmatpush1.msra.mxu0 0.0
      %1969 = vmatprep.subr.mxu0 0.0
      %1970 = vmatpush1.msra.mxu0 0.0
      %1971 = vmatprep.subr.mxu0 0.0
      %1972 = vmatpush1.msra.mxu0 0.0
      %1973 = vmatprep.subr.mxu0 0.0
      %1974 = vmatpush1.msra.mxu0 0.0
      %1975 = vmatprep.subr.mxu0 0.0
      %1976 = vmatpush1.msra.mxu0 0.0
      %1977 = vmatprep.subr.mxu0 0.0
      %1978 = vmatpush1.msra.mxu0 0.0
      %1979 = vmatprep.subr.mxu0 0.0
      %1980 = vmatpush1.msra.mxu0 0.0
      %1981 = vmatprep.subr.mxu0 0.0
      %1982 = vmatpush1.msra.mxu0 0.0
      %1983 = vmatprep.subr.mxu0 0.0
      %1984 = vmatpush1.msra.mxu0 0.0
      %1985 = vmatprep.subr.mxu0 0.0
      %1986 = vmatpush1.msra.mxu0 0.0
      %1987 = vmatprep.subr.mxu0 0.0
      %1988 = vmatpush1.msra.mxu0 0.0
      %1989 = vmatprep.subr.mxu0 0.0
      %1990 = vmatpush1.msra.mxu0 0.0
      %1991 = vmatprep.subr.mxu0 0.0
      %1992 = vmatpush1.msra.mxu0 0.0
      %1993 = vmatprep.subr.mxu0 0.0
      %1994 = vmatpush1.msra.mxu0 0.0
      %1995 = vmatprep.subr.mxu0 0.0
      %1996 = vmatpush1.msra.mxu0 0.0
      %1997 = vmatprep.subr.mxu0 0.0
      %1998 = vmatpush1.msra.mxu0 0.0
      %1999 = vmatprep.subr.mxu0 0.0
      %2000 = vmatpush1.msra.mxu0 0.0
      %2001 = vmatprep.subr.mxu0 0.0
      %2002 = vmatpush1.msra.mxu0 0.0
      %2003 = vmatprep.subr.mxu0 0.0
      %2004 = vmatpush1.msra.mxu0 0.0
      %2005 = vmatprep.subr.mxu0 0.0
      %2006 = vmatpush1.msra.mxu0 0.0
      %2007 = vmatprep.mubr.f32.mxu0 0.0
      %2008 = vmatmul.mubr.f32.gmra.mrb[0].mxu0 %v1938
      %v2009 = vpop.f32.mrb[0].mxu0
      %v2010 = vadd.f32 0.0, %v2009
      %v2011 = vpop.f32.mrb[0].mxu0
      %2012 = vmatprep.mubr.f32.mxu0 0.0
      %2013 = vmatmul.mubr.f32.gmra.mrb[0].mxu0 %v1941
      %v2014 = vpop.f32.mrb[0].mxu0
      %v2015 = vadd.f32 0.0, %v2014
      %v2016 = vpop.f32.mrb[0].mxu0
      %2017 = vdwg.mxu0
      %v2018 = vrcp.pop %v1276
      %v2019 = vmul.f32 1.0, %v2018
      %v2020 = vrcp.pop %v1279
      %v2021 = vmul.f32 1.0, %v2020
      %v2022 = vrcp.pop %v1282
      %v2023 = vmul.f32 1.0, %v2022
      %v2024 = vrcp.pop %v1285
      %v2025 = vmul.f32 1.0, %v2024
      %v2026 = vrcp.pop %v1288
      %v2027 = vmul.f32 1.0, %v2026
      %v2028 = vrcp.pop %v1291
      %v2029 = vmul.f32 1.0, %v2028
      %v2030 = vrcp.pop %v1294
      %v2031 = vmul.f32 1.0, %v2030
      %v2032 = vrcp.pop %v1297
      %v2033 = vmul.f32 1.0, %v2032
      %v2034 = vrcp.pop %v1300
      %v2035 = vmul.f32 1.0, %v2034
      %v2036 = vrcp.pop %v1303
      %v2037 = vmul.f32 1.0, %v2036
      %v2038 = vrcp.pop %v1306
      %v2039 = vmul.f32 1.0, %v2038
      %v2040 = vrcp.pop %v1309
      %v2041 = vmul.f32 1.0, %v2040
      %v2042 = vrcp.pop %v1312
      %v2043 = vmul.f32 1.0, %v2042
      %v2044 = vrcp.pop %v1315
      %v2045 = vmul.f32 1.0, %v2044
      %v2046 = vrcp.pop %v1318
      %v2047 = vmul.f32 1.0, %v2046
      %v2048 = vrcp.pop %v1321
      %v2049 = vmul.f32 1.0, %v2048
      %v2050 = vmul.f32 %v1401, %v2019
      %v2051 = vmul.f32 %v1406, %v2021
      %v2052 = vmul.f32 %v1488, %v2023
      %v2053 = vmul.f32 %v1493, %v2025
      %v2054 = vmul.f32 %v1575, %v2027
      %v2055 = vmul.f32 %v1580, %v2029
      %v2056 = vmul.f32 %v1662, %v2031
      %v2057 = vmul.f32 %v1667, %v2033
      %v2058 = vmul.f32 %v1749, %v2035
      %v2059 = vmul.f32 %v1754, %v2037
      %v2060 = vmul.f32 %v1836, %v2039
      %v2061 = vmul.f32 %v1841, %v2041
      %v2062 = vmul.f32 %v1923, %v2043
      %v2063 = vmul.f32 %v1928, %v2045
      %v2064 = vmul.f32 %v2010, %v2047
      %v2065 = vmul.f32 %v2015, %v2049
      %s2066 = sld [smem:[#allocation2]]
      %v2067 = vstv %s2066
      %v2068 = vmul.f32 %v2067, %v2050
      %v2069 = vmul.f32 %v2067, %v2051
      %v2070 = vmul.f32 %v2067, %v2052
      %v2071 = vmul.f32 %v2067, %v2053
      %v2072 = vmul.f32 %v2067, %v2054
      %v2073 = vmul.f32 %v2067, %v2055
      %v2074 = vmul.f32 %v2067, %v2056
      %v2075 = vmul.f32 %v2067, %v2057
      %v2076 = vmul.f32 %v2067, %v2058
      %v2077 = vmul.f32 %v2067, %v2059
      %v2078 = vmul.f32 %v2067, %v2060
      %v2079 = vmul.f32 %v2067, %v2061
      %v2080 = vmul.f32 %v2067, %v2062
      %v2081 = vmul.f32 %v2067, %v2063
      %v2082 = vmul.f32 %v2067, %v2064
      %v2083 = vmul.f32 %v2067, %v2065
      %v2084 = vadd.f32 %v2068, %v243
      %v2085 = vadd.f32 %v2069, %v244
      %v2086 = vadd.f32 %v2070, %v245
      %v2087 = vadd.f32 %v2071, %v246
      %v2088 = vadd.f32 %v2072, %v247
      %v2089 = vadd.f32 %v2073, %v248
      %v2090 = vadd.f32 %v2074, %v249
      %v2091 = vadd.f32 %v2075, %v250
      %v2092 = vadd.f32 %v2076, %v251
      %v2093 = vadd.f32 %v2077, %v252
      %v2094 = vadd.f32 %v2078, %v253
      %v2095 = vadd.f32 %v2079, %v254
      %v2096 = vadd.f32 %v2080, %v255
      %v2097 = vadd.f32 %v2081, %v256
      %v2098 = vadd.f32 %v2082, %v257
      %v2099 = vadd.f32 %v2083, %v258
      %2100 = vst.msk [vmem:[%s241] sm:$0xff] %vm267, %v2084
      %2101 = vst.msk [vmem:[%s241 + $0x8] sm:$0xff] %vm267, %v2085
      %2102 = vst.msk [vmem:[%s241 + $0x10] sm:$0xff] %vm267, %v2086
      %2103 = vst.msk [vmem:[%s241 + $0x18] sm:$0xff] %vm267, %v2087
      %2104 = vst.msk [vmem:[%s241 + $0x20] sm:$0xff] %vm267, %v2088
      %2105 = vst.msk [vmem:[%s241 + $0x28] sm:$0xff] %vm267, %v2089
      %2106 = vst.msk [vmem:[%s241 + $0x30] sm:$0xff] %vm267, %v2090
      %2107 = vst.msk [vmem:[%s241 + $0x38] sm:$0xff] %vm267, %v2091
      %2108 = vst.msk [vmem:[%s241 + $0x40] sm:$0xff] %vm267, %v2092
      %2109 = vst.msk [vmem:[%s241 + $0x48] sm:$0xff] %vm267, %v2093
      %2110 = vst.msk [vmem:[%s241 + $0x50] sm:$0xff] %vm267, %v2094
      %2111 = vst.msk [vmem:[%s241 + $0x58] sm:$0xff] %vm267, %v2095
      %2112 = vst.msk [vmem:[%s241 + $0x60] sm:$0xff] %vm267, %v2096
      %2113 = vst.msk [vmem:[%s241 + $0x68] sm:$0xff] %vm267, %v2097
      %2114 = vst.msk [vmem:[%s241 + $0x70] sm:$0xff] %vm267, %v2098
      %2115 = vst.msk [vmem:[%s241 + $0x78] sm:$0xff] %vm267, %v2099
      %s2116 = smul.u32 8, %s21
      %p2117 = scmp.lt.s32.totalorder %s20, 1
      %s2118 = scalar_select %p2117, %s20, 1
      %p2119 = scmp.lt.s32.totalorder %s2116, 15
      %s2120 = scalar_select %p2119, %s2116, 15
      %s2121 = smul.addr %s2120, 2
      %s2122 = smul.addr %s2118, 32
      %s2123 = sadd.s32 %s2121, %s2122
      %s2124 = smul.addr %s2123, 8
      %s2125 = scalar_lea.vmem %s4, %s2124
      // Predicated region
      $region37: #{col_attention.1} parent=35 // pred_check
        %p2126 = pneg %p139
      $region38: #{col_attention.1} parent=35 // pred_check_branch
        %2128 = sbr.rel (%p2126) target = $region40
      $region39: #{col_attention.1} parent=35 // pred_region
        %s2129 = smul.u32 8, %s21
      $region40: #{col_attention.1} parent=35 // pred_fallthru
        _
    $region36: #{col_attention.1} parent=5 // pred_fallthru
      _
    %p2130 = scmp.le.s32.totalorder 2, %s11
    // Predicated region
    $region41: #{col_attention.1} parent=5 // pred_check
      %p2131 = pneg %p2130
    $region42: #{col_attention.1} parent=5 // pred_check_branch
      %2133 = sbr.rel (%p2131) target = $region44
    $region43: #{col_attention.1} parent=5 // pred_region
      %s2134 = ssub.s32 %s11, 2
      // Predicated region
      $region45: #{col_attention.1} parent=43 // pred_check
        %p2135 = pneg %p145
      $region46: #{col_attention.1} parent=43 // pred_check_branch
        %2137 = sbr.rel (%p2135) target = $region48
      $region47: #{col_attention.1} parent=43 // pred_region
        %s2138 = smul.u32 8, %s23
        %p2139 = scmp.lt.s32.totalorder %s22, 1
        %s2140 = scalar_select %p2139, %s22, 1
        %p2141 = scmp.lt.s32.totalorder %s2138, 15
        %s2142 = scalar_select %p2141, %s2138, 15
        %s2143 = smul.addr %s2142, 2
        %s2144 = smul.addr %s2140, 32
        %s2145 = sadd.s32 %s2143, %s2144
        %s2146 = smul.addr %s2145, 8
        %s2147 = scalar_lea.vmem %s4, %s2146
      $region48: #{col_attention.1} parent=43 // pred_fallthru
        _
    $region44: #{col_attention.1} parent=5 // pred_fallthru
      _
  $region6: #{col_attention.1} parent=0 // loop_footer
    %s15 = sadd.s32 1, %s11
  $region7: #{col_attention.1} parent=0 // loop_footer_branch
    %10 = sbr.rel target = $region3
  $region8: #{col_attention.1} parent=0 // loop_exit
    _

</llo_original>
